<compile_context>
chip_gen: v7x
topology: tpu7x:2x2x1
jax: 0.10.0
libtpu: 0.0.40
codegen_flags: <defaults>
</compile_context>

<pallas_src>
import functools
import math

import jax
import jax.numpy as jnp
from jax.experimental import pallas as pl
from jax.experimental.pallas import tpu as pltpu


_BLOCK_NAMES = ("ln1_w", "ln1_b", "w_qkv", "b_qkv", "w_out", "b_out",
                "ln2_w", "ln2_b", "w_fc", "b_fc", "w_proj", "b_proj")
_NEG_INF = -1e30          # finite large-negative mask value (no NaN hazard)
_VMEM_LIMIT = 48 * 1024 * 1024   # leaves headroom under v7x's 64 MiB VMEM


# --------------------------------------------------------------------------- #
# BlockSpec helpers
# --------------------------------------------------------------------------- #
def _probe_single_buffering():
    """True iff this JAX supports pipeline_mode=pl.Buffered(1) on a BlockSpec."""
    if not hasattr(pl, "Buffered"):
        return False

    def _copy(x_ref, o_ref):
        o_ref[...] = x_ref[...]

    try:
        spec = pl.BlockSpec((8, 128), lambda i: (0, 0),
                            pipeline_mode=pl.Buffered(1))
        out = pl.pallas_call(
            _copy, grid=(1,), in_specs=[spec],
            out_specs=pl.BlockSpec((8, 128), lambda i: (0, 0)),
            out_shape=jax.ShapeDtypeStruct((8, 128), jnp.float32),
        )(jnp.zeros((8, 128), jnp.float32))
        jax.block_until_ready(out)
        return True
    except Exception:          # older jax: fall back to default double-buffer
        return False


_SINGLE_BUFFER_OK = _probe_single_buffering()


def _rep_spec(shape):
    """Grid-invariant full-array block; single-buffered when supported (the
    block index never changes, so double-buffering only wastes VMEM)."""
    nd = len(shape)
    idx = lambda *_, _nd=nd: (0,) * _nd
    if _SINGLE_BUFFER_OK:
        return pl.BlockSpec(tuple(shape), idx, pipeline_mode=pl.Buffered(1))
    return pl.BlockSpec(tuple(shape), idx)


def _layer_spec(stacked_shape):
    """Per-layer block of an (L, r, c)-stacked weight; default double-buffering
    so the next layer's weight DMA pipelines behind this layer's compute.
    (On v5e a deeper pl.Buffered(3) could be used to hide slower HBM.)"""
    nd = len(stacked_shape)
    return pl.BlockSpec((None,) + tuple(stacked_shape[1:]),
                        lambda b, l, _nd=nd: (l,) + (0,) * (_nd - 1))


# --------------------------------------------------------------------------- #
# In-kernel building blocks
# --------------------------------------------------------------------------- #
def _layer_norm(x, w, b):
    x = x.astype(jnp.float32)
    mu = jnp.mean(x, axis=-1, keepdims=True)
    var = jnp.mean(jnp.square(x - mu), axis=-1, keepdims=True)
    return (x - mu) * jax.lax.rsqrt(var + 1e-5) * w + b


def _residual_block(x, lw, *, n_heads, attn_bias):
    """CLIP ResidualAttentionBlock on a (BB, S, D) block of sequences.
    Matmul operands in bf16, accumulation / LN / softmax in f32."""
    (ln1_w, ln1_b, w_qkv, b_qkv, w_out, b_out,
     ln2_w, ln2_b, w_fc, b_fc, w_proj, b_proj) = lw
    bb, S, D = x.shape
    dh = D // n_heads
    scale = 1.0 / math.sqrt(dh)

    # --- multi-head self-attention ----------------------------------------- #
    h = _layer_norm(x, ln1_w, ln1_b).astype(jnp.bfloat16)
    qkv = jnp.dot(h, w_qkv, preferred_element_type=jnp.float32) + b_qkv  # (bb,S,3D)
    attn = jnp.zeros((bb, S, D), jnp.float32)
    # TODO(synk): at real head counts (12+), fold heads into the einsum batch
    # dim instead of this small static loop (2 heads here).
    for hd in range(n_heads):
        q = (qkv[:, :, hd * dh:(hd + 1) * dh] * scale).astype(jnp.bfloat16)
        k = qkv[:, :, D + hd * dh:D + (hd + 1) * dh].astype(jnp.bfloat16)
        v = qkv[:, :, 2 * D + hd * dh:2 * D + (hd + 1) * dh].astype(jnp.bfloat16)
        s = jnp.einsum("bqd,bkd->bqk", q, k,
                       preferred_element_type=jnp.float32)
        s = s + attn_bias                       # additive mask (finite -1e30)
        s = s - jnp.max(s, axis=-1, keepdims=True)
        p = jnp.exp(s)
        p = p / jnp.sum(p, axis=-1, keepdims=True)   # exact softmax (parity)
        o_h = jnp.einsum("bqk,bkd->bqd", p.astype(jnp.bfloat16), v,
                         preferred_element_type=jnp.float32)
        # concat-over-heads @ W_out == sum_h o_h @ W_out[h*dh:(h+1)*dh, :]
        attn = attn + jnp.dot(o_h.astype(jnp.bfloat16),
                              w_out[hd * dh:(hd + 1) * dh, :],
                              preferred_element_type=jnp.float32)
    x = x + attn + b_out

    # --- MLP (QuickGELU) ---------------------------------------------------- #
    h = _layer_norm(x, ln2_w, ln2_b).astype(jnp.bfloat16)
    h = jnp.dot(h, w_fc, preferred_element_type=jnp.float32) + b_fc
    h = h * jax.nn.sigmoid(1.702 * h)
    x = x + jnp.dot(h.astype(jnp.bfloat16), w_proj,
                    preferred_element_type=jnp.float32) + b_proj
    return x


# --------------------------------------------------------------------------- #
# Fused encoder kernels (one pallas_call per encoder, layer = grid axis)
# --------------------------------------------------------------------------- #
def _image_encoder_kernel(patches_ref, pos_ref, bias_ref, conv_w_ref,
                          ln_pre_w_ref, ln_pre_b_ref,
                          ln1_w_ref, ln1_b_ref, w_qkv_ref, b_qkv_ref,
                          w_out_ref, b_out_ref, ln2_w_ref, ln2_b_ref,
                          w_fc_ref, b_fc_ref, w_proj_ref, b_proj_ref,
                          ln_post_w_ref, ln_post_b_ref, proj_ref,
                          o_ref, x_scratch, *, n_heads):
    l = pl.program_id(1)

    @pl.when(l == 0)
    def _init():
        # Patch embedding with contraction dim K; the class token is already
        # folded into pos_embedding row 0 (patch row 0 is zero).
        emb = jnp.dot(patches_ref[...], conv_w_ref[...],
                      preferred_element_type=jnp.float32)
        x0 = emb + pos_ref[...]
        x_scratch[...] = _layer_norm(x0, ln_pre_w_ref[...], ln_pre_b_ref[...])

    lw = (ln1_w_ref[...], ln1_b_ref[...], w_qkv_ref[...], b_qkv_ref[...],
          w_out_ref[...], b_out_ref[...], ln2_w_ref[...], ln2_b_ref[...],
          w_fc_ref[...], b_fc_ref[...], w_proj_ref[...], b_proj_ref[...])
    x_scratch[...] = _residual_block(x_scratch[...], lw, n_heads=n_heads,
                                     attn_bias=bias_ref[...])

    @pl.when(l == pl.num_programs(1) - 1)
    def _finalize():
        cls_tok = _layer_norm(x_scratch[...][:, 0, :],
                              ln_post_w_ref[...], ln_post_b_ref[...])
        feat = jnp.dot(cls_tok.astype(jnp.bfloat16), proj_ref[...],
                       preferred_element_type=jnp.float32)
        # fused L2 normalisation (with eps) — saves a separate pass later
        feat = feat * jax.lax.rsqrt(
            jnp.sum(feat * feat, axis=-1, keepdims=True) + 1e-12)
        o_ref[...] = feat.astype(o_ref.dtype)


def _text_encoder_kernel(eot_ref, prompt_ref, pos_ref, bias_ref,
                         ln1_w_ref, ln1_b_ref, w_qkv_ref, b_qkv_ref,
                         w_out_ref, b_out_ref, ln2_w_ref, ln2_b_ref,
                         w_fc_ref, b_fc_ref, w_proj_ref, b_proj_ref,
                         ln_final_w_ref, ln_final_b_ref, tproj_ref,
                         o_ref, x_scratch, *, n_heads, cls_block):
    c_blk = pl.program_id(0)
    l = pl.program_id(1)

    @pl.when(l == 0)
    def _init():
        x_scratch[...] = prompt_ref[...].astype(jnp.float32) + pos_ref[...]

    lw = (ln1_w_ref[...], ln1_b_ref[...], w_qkv_ref[...], b_qkv_ref[...],
          w_out_ref[...], b_out_ref[...], ln2_w_ref[...], ln2_b_ref[...],
          w_fc_ref[...], b_fc_ref[...], w_proj_ref[...], b_proj_ref[...])
    x_scratch[...] = _residual_block(x_scratch[...], lw, n_heads=n_heads,
                                     attn_bias=bias_ref[...])

    @pl.when(l == pl.num_programs(1) - 1)
    def _finalize():
        # EOT-token gather: dynamic sublane read per class (index from SMEM),
        # ln_final applied only to the gathered rows (LN is per-token: exact).
        rows = []
        for c in range(cls_block):
            eot = eot_ref[c_blk * cls_block + c]
            rows.append(x_scratch[c, pl.ds(eot, 1), :])        # (1, D)
        rows = jnp.concatenate(rows, axis=0)                    # (cls_block, D)
        rows = _layer_norm(rows, ln_final_w_ref[...], ln_final_b_ref[...])
        feat = jnp.dot(rows.astype(jnp.bfloat16), tproj_ref[...],
                       preferred_element_type=jnp.float32)
        feat = feat * jax.lax.rsqrt(
            jnp.sum(feat * feat, axis=-1, keepdims=True) + 1e-12)
        o_ref[...] = feat.astype(o_ref.dtype)


def _logits_kernel(img_ref, txt_ref, ls_ref, o_ref):
    # features are already L2-normalised inside the encoder kernels
    logits = jax.lax.dot_general(img_ref[...], txt_ref[...],
                                 (((1,), (1,)), ((), ())),
                                 preferred_element_type=jnp.float32)
    scale = jnp.exp(jnp.broadcast_to(ls_ref[0], (1, 1)))        # scalar (SMEM)
    o_ref[...] = (logits * scale).astype(o_ref.dtype)


# --------------------------------------------------------------------------- #
# Wrappers: image encoder, PromptLearner, text encoder, CustomCLIP
# --------------------------------------------------------------------------- #
def image_encoder(image, vp, n_heads, patch_size):
    B, C, H, W_img = image.shape                   # NCHW, like PyTorch
    ps = patch_size
    gh, gw = H // ps, W_img // ps
    P, K = gh * gw, C * ps * ps
    D = vp["conv_w"].shape[-1]
    E = vp["proj"].shape[-1]
    st = vp["stacked"]
    L = st["w_qkv"].shape[0]

    s_real = P + 1
    s_pad = -(-s_real // 8) * 8                    # sublane-friendly token axis
    bb = min(B, 8)                                 # batch elements per grid step
    n_b = -(-B // bb)
    b_pad = n_b * bb

    # channel-major patch unfold == nn.Conv2d(C, width, ps, stride=ps, bias=False)
    patches = (image.reshape(B, C, gh, ps, gw, ps)
                    .transpose(0, 2, 4, 1, 3, 5)
                    .reshape(B, P, K))
    patches_seq = jnp.zeros((b_pad, s_pad, K), jnp.bfloat16)
    patches_seq = patches_seq.at[:B, 1:1 + P, :].set(patches.astype(jnp.bfloat16))

    # fold class_embedding into pos_embedding row 0; pad token axis with zeros
    pos = vp["pos_embedding"].at[0, :].add(vp["class_embedding"][0])
    pos = jnp.pad(pos, ((0, s_pad - s_real), (0, 0)))

    # additive attention bias masking padded key tokens (built once, hoisted)
    col = jnp.arange(s_pad)[None, :]
    bias = jnp.where(col < s_real, 0.0, _NEG_INF).astype(jnp.float32)
    bias = jnp.broadcast_to(bias, (s_pad, s_pad))

    rep_ws = [pos, bias, vp["conv_w"], vp["ln_pre_w"], vp["ln_pre_b"]]
    layer_ws = [st[n] for n in _BLOCK_NAMES]
    tail_ws = [vp["ln_post_w"], vp["ln_post_b"], vp["proj"]]

    out = pl.pallas_call(
        functools.partial(_image_encoder_kernel, n_heads=n_heads),
        grid=(n_b, L),                              # batch (parallel), layer (serial)
        in_specs=([pl.BlockSpec((bb, s_pad, K), lambda b, l: (b, 0, 0))]
                  + [_rep_spec(w.shape) for w in rep_ws]
                  + [_layer_spec(w.shape) for w in layer_ws]
                  + [_rep_spec(w.shape) for w in tail_ws]),
        out_specs=pl.BlockSpec((bb, E), lambda b, l: (b, 0)),
        out_shape=jax.ShapeDtypeStruct((b_pad, E), jnp.float32),
        scratch_shapes=[pltpu.VMEM((bb, s_pad, D), jnp.float32)],
        compiler_params=pltpu.CompilerParams(
            dimension_semantics=("parallel", "arbitrary"),
            vmem_limit_bytes=_VMEM_LIMIT),
    )(patches_seq, *rep_ws, *layer_ws, *tail_ws)
    return out[:B]


def prompt_learner_forward(p):
    # CSC = False, class_token_position == 'end'
    n_cls = p["token_prefix"].shape[0]
    ctx = jnp.broadcast_to(p["ctx"][None], (n_cls,) + p["ctx"].shape)
    return jnp.concatenate([p["token_prefix"], ctx, p["token_suffix"]], axis=1)


def text_encoder(prompts, tokenized_prompts, tp, n_heads):
    n_cls, S, D = prompts.shape
    E = tp["text_projection"].shape[-1]
    st = tp["stacked"]
    L = st["w_qkv"].shape[0]

    cb = min(n_cls, 8)                              # classes per grid step
    n_c = -(-n_cls // cb)
    c_pad = n_c * cb

    # TODO(synk): EOT index = argmax(token ids) relies on the CLIP convention
    # that the EOT token has the largest vocabulary id (true for the real
    # tokenizer; the synthetic vocab here respects it).
    eot = jnp.argmax(tokenized_prompts, axis=-1).astype(jnp.int32)
    eot = jnp.pad(eot, (0, c_pad - n_cls))

    prompts_p = jnp.zeros((c_pad, S, D), jnp.bfloat16)
    prompts_p = prompts_p.at[:n_cls].set(prompts.astype(jnp.bfloat16))

    # CLIP causal mask, hoisted out of the kernel; finite large-negative bias.
    row = jnp.arange(S)[:, None]
    col = jnp.arange(S)[None, :]
    bias = jnp.where(col > row, _NEG_INF, 0.0).astype(jnp.float32)

    rep_ws = [tp["pos_embedding"], bias]
    layer_ws = [st[n] for n in _BLOCK_NAMES]
    tail_ws = [tp["ln_final_w"], tp["ln_final_b"], tp["text_projection"]]

    out = pl.pallas_call(
        functools.partial(_text_encoder_kernel, n_heads=n_heads, cls_block=cb),
        grid=(n_c, L),                              # classes (parallel), layer (serial)
        in_specs=([pl.BlockSpec(memory_space=pltpu.MemorySpace.SMEM),  # eot ids
                   pl.BlockSpec((cb, S, D), lambda c, l: (c, 0, 0))]
                  + [_rep_spec(w.shape) for w in rep_ws]
                  + [_layer_spec(w.shape) for w in layer_ws]
                  + [_rep_spec(w.shape) for w in tail_ws]),
        out_specs=pl.BlockSpec((cb, E), lambda c, l: (c, 0)),
        out_shape=jax.ShapeDtypeStruct((c_pad, E), jnp.float32),
        scratch_shapes=[pltpu.VMEM((cb, S, D), jnp.float32)],
        compiler_params=pltpu.CompilerParams(
            dimension_semantics=("parallel", "arbitrary"),
            vmem_limit_bytes=_VMEM_LIMIT),
    )(eot, prompts_p, *rep_ws, *layer_ws, *tail_ws)
    return out[:n_cls]


def clip_logits(image_features, text_features, logit_scale):
    B, n_cls = image_features.shape[0], text_features.shape[0]
    return pl.pallas_call(
        _logits_kernel,
        in_specs=[pl.BlockSpec(memory_space=pltpu.MemorySpace.VMEM),
                  pl.BlockSpec(memory_space=pltpu.MemorySpace.VMEM),
                  pl.BlockSpec(memory_space=pltpu.MemorySpace.SMEM)],
        out_specs=pl.BlockSpec(memory_space=pltpu.MemorySpace.VMEM),
        out_shape=jax.ShapeDtypeStruct((B, n_cls), jnp.float32),
    )(image_features, text_features, logit_scale.reshape(1))


def custom_clip_forward(image, params):
    image_features = image_encoder(image, params["visual"],
                                   params["vision_heads"], params["patch_size"])
    prompts = prompt_learner_forward(params["prompt_learner"])
    text_features = text_encoder(prompts, params["tokenized_prompts"],
                                 params["text"], params["text_heads"])
    return clip_logits(image_features, text_features, params["logit_scale"])


# --------------------------------------------------------------------------- #
# Deterministic synthetic parameter construction
# --------------------------------------------------------------------------- #
def _init_block(key, width):
    k = jax.random.split(key, 4)
    f32, bf16 = jnp.float32, jnp.bfloat16
    return dict(
        ln1_w=jnp.ones((1, width), f32), ln1_b=jnp.zeros((1, width), f32),
        w_qkv=(0.02 * jax.random.normal(k[0], (width, 3 * width), f32)).astype(bf16),
        b_qkv=jnp.zeros((1, 3 * width), f32),
        w_out=(0.02 * jax.random.normal(k[1], (width, width), f32)).astype(bf16),
        b_out=jnp.zeros((1, width), f32),
        ln2_w=jnp.ones((1, width), f32), ln2_b=jnp.zeros((1, width), f32),
        w_fc=(0.02 * jax.random.normal(k[2], (width, 4 * width), f32)).astype(bf16),
        b_fc=jnp.zeros((1, 4 * width), f32),
        w_proj=(0.02 * jax.random.normal(k[3], (4 * width, width), f32)).astype(bf16),
        b_proj=jnp.zeros((1, width), f32),
    )


def _stack_blocks(blocks):
    # (L, ...) stacked per-layer weights; each becomes a layer-indexed BlockSpec
    # (DMA-pipelined over the trailing 'arbitrary' layer grid axis).
    return {n: jnp.stack([blk[n] for blk in blocks], axis=0) for n in _BLOCK_NAMES}


def build_params(key):
    f32, bf16 = jnp.float32, jnp.bfloat16
    # small synthetic CLIP config
    C, IMG, PATCH = 3, 16, 8
    VIS_W, VIS_L, VIS_H = 32, 1, 2
    TXT_W, TXT_L, TXT_H = 32, 1, 2
    EMBED = 32
    N_CLS, N_CTX, SEQ, VOCAB = 3, 4, 8, 64

    keys = jax.random.split(key, 16)
    n_patches = (IMG // PATCH) ** 2

    visual = dict(
        conv_w=(0.02 * jax.random.normal(keys[0], (C * PATCH * PATCH, VIS_W), f32)
                ).astype(bf16),
        class_embedding=0.02 * jax.random.normal(keys[1], (1, VIS_W), f32),
        pos_embedding=0.02 * jax.random.normal(keys[2], (n_patches + 1, VIS_W), f32),
        ln_pre_w=jnp.ones((1, VIS_W), f32), ln_pre_b=jnp.zeros((1, VIS_W), f32),
        stacked=_stack_blocks([_init_block(k, VIS_W)
                               for k in jax.random.split(keys[3], VIS_L)]),
        ln_post_w=jnp.ones((1, VIS_W), f32), ln_post_b=jnp.zeros((1, VIS_W), f32),
        proj=(0.02 * jax.random.normal(keys[4], (VIS_W, EMBED), f32)).astype(bf16),
    )

    text = dict(
        pos_embedding=0.02 * jax.random.normal(keys[5], (SEQ, TXT_W), f32),
        stacked=_stack_blocks([_init_block(k, TXT_W)
                               for k in jax.random.split(keys[6], TXT_L)]),
        ln_final_w=jnp.ones((1, TXT_W), f32), ln_final_b=jnp.zeros((1, TXT_W), f32),
        text_projection=(0.02 * jax.random.normal(keys[7], (TXT_W, EMBED), f32)
                         ).astype(bf16),
    )

    # PromptLearner buffers.  Synthetic tokenization:
    #   [SOS=1, X,X,X,X (ctx placeholders=2), <classname token>, EOT=VOCAB-1, PAD=0]
    # TODO(synk): real _Tokenizer()/clip.tokenize string handling has no Pallas
    # equivalent; fixed synthetic token ids stand in for it.
    tokenized = jnp.stack(
        [jnp.array([1, 2, 2, 2, 2, 10 + i, VOCAB - 1, 0], jnp.int32)
         for i in range(N_CLS)])                            # (N_CLS, SEQ)
    token_embedding = 0.02 * jax.random.normal(keys[8], (VOCAB, TXT_W), f32)
    embedding = token_embedding[tokenized]                  # (N_CLS, SEQ, TXT_W)
    prompt_learner = dict(
        token_prefix=embedding[:, :1, :],                   # SOS embedding
        token_suffix=embedding[:, 1 + N_CTX:, :],           # classname + EOT + pad
        ctx=0.02 * jax.random.normal(keys[9], (N_CTX, TXT_W), f32),  # shared ctx
    )

    return dict(
        visual=visual, text=text, prompt_learner=prompt_learner,
        tokenized_prompts=tokenized,
        logit_scale=jnp.array(math.log(1.0 / 0.07), f32),
        vision_heads=VIS_H, text_heads=TXT_H, patch_size=PATCH,
    )


# --------------------------------------------------------------------------- #
if __name__ == "__main__":
    key = jax.random.PRNGKey(0)
    pkey, xkey = jax.random.split(key)
    params = build_params(pkey)

    # image: NCHW, batch=2, channels=3, spatial=16
    image = jax.random.normal(xkey, (2, 3, 16, 16), jnp.float32)

    logits = custom_clip_forward(image, params)
    logits = jax.block_until_ready(logits)

    assert logits.shape == (2, 3), logits.shape
    assert bool(jnp.all(jnp.isfinite(logits)))
    print("KERNEL_OK")
</pallas_src>

<mosaic_0001>
module attributes {stable_mosaic.version = 11 : i64} {
  func.func @_copy(%arg0: i32, %arg1: memref<8x128xf32, #tpu.memory_space<vmem>>, %arg2: memref<8x128xf32, #tpu.memory_space<vmem>>) attributes {dimension_semantics = [#tpu.dimension_semantics<arbitrary>], iteration_bounds = array<i64: 1>, scalar_prefetch = 0 : i64, scratch_operands = 0 : i64, tpu.core_type = #tpu.core_type<tc>, window_params = [{pipeline_mode = #tpu.pipeline_mode<synchronous>, transform_indices = @transform_0, window_bounds = array<i64: 8, 128>}, {pipeline_mode = #tpu.pipeline_mode<synchronous>, transform_indices = @transform_1, window_bounds = array<i64: 8, 128>}]} {
    %c0 = arith.constant 0 : index
    %c0_0 = arith.constant 0 : index
    %0 = vector.load %arg1[%c0, %c0_0] : memref<8x128xf32, #tpu.memory_space<vmem>>, vector<8x128xf32>
    %c0_1 = arith.constant 0 : index
    %c0_2 = arith.constant 0 : index
    %1 = vector.load %arg2[%c0_1, %c0_2] : memref<8x128xf32, #tpu.memory_space<vmem>>, vector<8x128xf32>
    tpu.vector_store %arg2[%c0_1, %c0_2], %0 {strides = array<i32>} : memref<8x128xf32, #tpu.memory_space<vmem>>, vector<8x128xf32>,
    return
  }
  func.func @transform_0(%arg0: i32) -> (i32, i32) {
    %c0_i32 = arith.constant 0 : i32
    %c0_i32_0 = arith.constant 0 : i32
    %c0_i32_1 = arith.constant 0 : i32
    return %c0_i32, %c0_i32_0 : i32, i32
  }
  func.func @transform_1(%arg0: i32) -> (i32, i32) {
    %c0_i32 = arith.constant 0 : i32
    %c0_i32_0 = arith.constant 0 : i32
    %c0_i32_1 = arith.constant 0 : i32
    return %c0_i32, %c0_i32_0 : i32, i32
  }
}

module attributes {stable_mosaic.version = 11 : i64} {
  func.func @_image_encoder_kernel(%arg0: i32, %arg1: i32, %arg2: memref<2x8x192xbf16, #tpu.memory_space<vmem>>, %arg3: memref<8x32xf32, #tpu.memory_space<vmem>>, %arg4: memref<8x8xf32, #tpu.memory_space<vmem>>, %arg5: memref<192x32xbf16, #tpu.memory_space<vmem>>, %arg6: memref<1x32xf32, #tpu.memory_space<vmem>>, %arg7: memref<1x32xf32, #tpu.memory_space<vmem>>, %arg8: memref<1x1x32xf32, #tpu.memory_space<vmem>>, %arg9: memref<1x1x32xf32, #tpu.memory_space<vmem>>, %arg10: memref<1x32x96xbf16, #tpu.memory_space<vmem>>, %arg11: memref<1x1x96xf32, #tpu.memory_space<vmem>>, %arg12: memref<1x32x32xbf16, #tpu.memory_space<vmem>>, %arg13: memref<1x1x32xf32, #tpu.memory_space<vmem>>, %arg14: memref<1x1x32xf32, #tpu.memory_space<vmem>>, %arg15: memref<1x1x32xf32, #tpu.memory_space<vmem>>, %arg16: memref<1x32x128xbf16, #tpu.memory_space<vmem>>, %arg17: memref<1x1x128xf32, #tpu.memory_space<vmem>>, %arg18: memref<1x128x32xbf16, #tpu.memory_space<vmem>>, %arg19: memref<1x1x32xf32, #tpu.memory_space<vmem>>, %arg20: memref<1x32xf32, #tpu.memory_space<vmem>>, %arg21: memref<1x32xf32, #tpu.memory_space<vmem>>, %arg22: memref<32x32xbf16, #tpu.memory_space<vmem>>, %arg23: memref<2x32xf32, #tpu.memory_space<vmem>>, %arg24: memref<2x8x32xf32, #tpu.memory_space<vmem>>) attributes {dimension_semantics = [#tpu.dimension_semantics<parallel>, #tpu.dimension_semantics<arbitrary>], iteration_bounds = array<i64: 1, 1>, scalar_prefetch = 0 : i64, scratch_operands = 1 : i64, tpu.core_type = #tpu.core_type<tc>, window_params = [{transform_indices = @transform_0, window_bounds = array<i64: 2, 8, 192>}, {pipeline_mode = #tpu.pipeline_mode<synchronous>, transform_indices = @transform_1, window_bounds = array<i64: 8, 32>}, {pipeline_mode = #tpu.pipeline_mode<synchronous>, transform_indices = @transform_2, window_bounds = array<i64: 8, 8>}, {pipeline_mode = #tpu.pipeline_mode<synchronous>, transform_indices = @transform_3, window_bounds = array<i64: 192, 32>}, {pipeline_mode = #tpu.pipeline_mode<synchronous>, transform_indices = @transform_4, window_bounds = array<i64: 1, 32>}, {pipeline_mode = #tpu.pipeline_mode<synchronous>, transform_indices = @transform_5, window_bounds = array<i64: 1, 32>}, {transform_indices = @transform_6, window_bounds = array<i64: 1, 1, 32>}, {transform_indices = @transform_7, window_bounds = array<i64: 1, 1, 32>}, {transform_indices = @transform_8, window_bounds = array<i64: 1, 32, 96>}, {transform_indices = @transform_9, window_bounds = array<i64: 1, 1, 96>}, {transform_indices = @transform_10, window_bounds = array<i64: 1, 32, 32>}, {transform_indices = @transform_11, window_bounds = array<i64: 1, 1, 32>}, {transform_indices = @transform_12, window_bounds = array<i64: 1, 1, 32>}, {transform_indices = @transform_13, window_bounds = array<i64: 1, 1, 32>}, {transform_indices = @transform_14, window_bounds = array<i64: 1, 32, 128>}, {transform_indices = @transform_15, window_bounds = array<i64: 1, 1, 128>}, {transform_indices = @transform_16, window_bounds = array<i64: 1, 128, 32>}, {transform_indices = @transform_17, window_bounds = array<i64: 1, 1, 32>}, {pipeline_mode = #tpu.pipeline_mode<synchronous>, transform_indices = @transform_18, window_bounds = array<i64: 1, 32>}, {pipeline_mode = #tpu.pipeline_mode<synchronous>, transform_indices = @transform_19, window_bounds = array<i64: 1, 32>}, {pipeline_mode = #tpu.pipeline_mode<synchronous>, transform_indices = @transform_20, window_bounds = array<i64: 32, 32>}, {transform_indices = @transform_21, window_bounds = array<i64: 2, 32>}]} {
    %c0_i32 = arith.constant 0 : i32
    %0 = arith.cmpi eq, %arg1, %c0_i32 : i32
    %1 = arith.extui %0 : i1 to i32
    %c0_i32_0 = arith.constant 0 : i32
    %2 = arith.cmpi ne, %1, %c0_i32_0 : i32
    scf.if %2 {
      %c0_73 = arith.constant 0 : index
      %c0_74 = arith.constant 0 : index
      %c0_75 = arith.constant 0 : index
      %164 = vector.load %arg2[%c0_73, %c0_74, %c0_75] : memref<2x8x192xbf16, #tpu.memory_space<vmem>>, vector<2x8x192xbf16>
      %c0_76 = arith.constant 0 : index
      %c0_77 = arith.constant 0 : index
      %165 = vector.load %arg5[%c0_76, %c0_77] : memref<192x32xbf16, #tpu.memory_space<vmem>>, vector<192x32xbf16>
      %cst_78 = arith.constant dense<0.000000e+00> : vector<2x8x32xf32>
      %166 = tpu.matmul %164, %165, %cst_78 {dimension_numbers = #tpu.dot_dimension_numbers<[2], [0], [0, 1], [1], [0, 0, 0, 1, 1, 1], [], []>} : vector<2x8x192xbf16>, vector<192x32xbf16>, vector<2x8x32xf32> -> vector<2x8x32xf32>
      %c0_79 = arith.constant 0 : index
      %c0_80 = arith.constant 0 : index
      %167 = vector.load %arg3[%c0_79, %c0_80] : memref<8x32xf32, #tpu.memory_space<vmem>>, vector<8x32xf32>
      %168 = vector.shape_cast %167 : vector<8x32xf32> to vector<1x8x32xf32>
      %169 = vector.broadcast %168 : vector<1x8x32xf32> to vector<2x8x32xf32>
      %170 = arith.addf %166, %169 : vector<2x8x32xf32>
      %c0_81 = arith.constant 0 : index
      %c0_82 = arith.constant 0 : index
      %171 = vector.load %arg6[%c0_81, %c0_82] : memref<1x32xf32, #tpu.memory_space<vmem>>, vector<1x32xf32>
      %c0_83 = arith.constant 0 : index
      %c0_84 = arith.constant 0 : index
      %172 = vector.load %arg7[%c0_83, %c0_84] : memref<1x32xf32, #tpu.memory_space<vmem>>, vector<1x32xf32>
      %cst_85 = arith.constant dense<0.000000e+00> : vector<2x8xf32>
      %173 = vector.multi_reduction <add>, %170, %cst_85 [2] : vector<2x8x32xf32> to vector<2x8xf32>
      %174 = vector.shape_cast %173 : vector<2x8xf32> to vector<2x8x1xf32>
      %cst_86 = arith.constant 3.200000e+01 : f32
      %175 = vector.broadcast %cst_86 : f32 to vector<2x8x1xf32>
      %176 = arith.divf %174, %175 : vector<2x8x1xf32>
      %177 = vector.broadcast %176 : vector<2x8x1xf32> to vector<2x8x32xf32>
      %178 = arith.subf %170, %177 : vector<2x8x32xf32>
      %179 = arith.mulf %178, %178 : vector<2x8x32xf32>
      %cst_87 = arith.constant dense<0.000000e+00> : vector<2x8xf32>
      %180 = vector.multi_reduction <add>, %179, %cst_87 [2] : vector<2x8x32xf32> to vector<2x8xf32>
      %181 = vector.shape_cast %180 : vector<2x8xf32> to vector<2x8x1xf32>
      %cst_88 = arith.constant 3.200000e+01 : f32
      %182 = vector.broadcast %cst_88 : f32 to vector<2x8x1xf32>
      %183 = arith.divf %181, %182 : vector<2x8x1xf32>
      %184 = vector.broadcast %176 : vector<2x8x1xf32> to vector<2x8x32xf32>
      %185 = arith.subf %170, %184 : vector<2x8x32xf32>
      %cst_89 = arith.constant 9.99999974E-6 : f32
      %186 = vector.broadcast %cst_89 : f32 to vector<2x8x1xf32>
      %187 = arith.addf %183, %186 : vector<2x8x1xf32>
      %188 = math.rsqrt %187 : vector<2x8x1xf32>
      %189 = vector.broadcast %188 : vector<2x8x1xf32> to vector<2x8x32xf32>
      %190 = arith.mulf %185, %189 : vector<2x8x32xf32>
      %191 = vector.shape_cast %171 : vector<1x32xf32> to vector<1x1x32xf32>
      %192 = vector.broadcast %191 : vector<1x1x32xf32> to vector<2x8x32xf32>
      %193 = arith.mulf %190, %192 : vector<2x8x32xf32>
      %194 = vector.shape_cast %172 : vector<1x32xf32> to vector<1x1x32xf32>
      %195 = vector.broadcast %194 : vector<1x1x32xf32> to vector<2x8x32xf32>
      %196 = arith.addf %193, %195 : vector<2x8x32xf32>
      %c0_90 = arith.constant 0 : index
      %c0_91 = arith.constant 0 : index
      %c0_92 = arith.constant 0 : index
      %197 = vector.load %arg24[%c0_90, %c0_91, %c0_92] : memref<2x8x32xf32, #tpu.memory_space<vmem>>, vector<2x8x32xf32>
      tpu.vector_store %arg24[%c0_90, %c0_91, %c0_92], %196 {strides = array<i32>} : memref<2x8x32xf32, #tpu.memory_space<vmem>>, vector<2x8x32xf32>,
    } else {
    }
    %c0 = arith.constant 0 : index
    %c0_1 = arith.constant 0 : index
    %c0_2 = arith.constant 0 : index
    %3 = vector.load %arg8[%c0, %c0_1, %c0_2] : memref<1x1x32xf32, #tpu.memory_space<vmem>>, vector<1x1x32xf32>
    %4 = vector.shape_cast %3 : vector<1x1x32xf32> to vector<1x32xf32>
    %c0_3 = arith.constant 0 : index
    %c0_4 = arith.constant 0 : index
    %c0_5 = arith.constant 0 : index
    %5 = vector.load %arg9[%c0_3, %c0_4, %c0_5] : memref<1x1x32xf32, #tpu.memory_space<vmem>>, vector<1x1x32xf32>
    %6 = vector.shape_cast %5 : vector<1x1x32xf32> to vector<1x32xf32>
    %c0_6 = arith.constant 0 : index
    %c0_7 = arith.constant 0 : index
    %c0_8 = arith.constant 0 : index
    %7 = vector.load %arg10[%c0_6, %c0_7, %c0_8] : memref<1x32x96xbf16, #tpu.memory_space<vmem>>, vector<1x32x96xbf16>
    %8 = vector.shape_cast %7 : vector<1x32x96xbf16> to vector<32x96xbf16>
    %c0_9 = arith.constant 0 : index
    %c0_10 = arith.constant 0 : index
    %c0_11 = arith.constant 0 : index
    %9 = vector.load %arg11[%c0_9, %c0_10, %c0_11] : memref<1x1x96xf32, #tpu.memory_space<vmem>>, vector<1x1x96xf32>
    %10 = vector.shape_cast %9 : vector<1x1x96xf32> to vector<1x96xf32>
    %c0_12 = arith.constant 0 : index
    %c0_13 = arith.constant 0 : index
    %c0_14 = arith.constant 0 : index
    %11 = vector.load %arg12[%c0_12, %c0_13, %c0_14] : memref<1x32x32xbf16, #tpu.memory_space<vmem>>, vector<1x32x32xbf16>
    %12 = vector.shape_cast %11 : vector<1x32x32xbf16> to vector<32x32xbf16>
    %c0_15 = arith.constant 0 : index
    %c0_16 = arith.constant 0 : index
    %c0_17 = arith.constant 0 : index
    %13 = vector.load %arg13[%c0_15, %c0_16, %c0_17] : memref<1x1x32xf32, #tpu.memory_space<vmem>>, vector<1x1x32xf32>
    %14 = vector.shape_cast %13 : vector<1x1x32xf32> to vector<1x32xf32>
    %c0_18 = arith.constant 0 : index
    %c0_19 = arith.constant 0 : index
    %c0_20 = arith.constant 0 : index
    %15 = vector.load %arg14[%c0_18, %c0_19, %c0_20] : memref<1x1x32xf32, #tpu.memory_space<vmem>>, vector<1x1x32xf32>
    %16 = vector.shape_cast %15 : vector<1x1x32xf32> to vector<1x32xf32>
    %c0_21 = arith.constant 0 : index
    %c0_22 = arith.constant 0 : index
    %c0_23 = arith.constant 0 : index
    %17 = vector.load %arg15[%c0_21, %c0_22, %c0_23] : memref<1x1x32xf32, #tpu.memory_space<vmem>>, vector<1x1x32xf32>
    %18 = vector.shape_cast %17 : vector<1x1x32xf32> to vector<1x32xf32>
    %c0_24 = arith.constant 0 : index
    %c0_25 = arith.constant 0 : index
    %c0_26 = arith.constant 0 : index
    %19 = vector.load %arg16[%c0_24, %c0_25, %c0_26] : memref<1x32x128xbf16, #tpu.memory_space<vmem>>, vector<1x32x128xbf16>
    %20 = vector.shape_cast %19 : vector<1x32x128xbf16> to vector<32x128xbf16>
    %c0_27 = arith.constant 0 : index
    %c0_28 = arith.constant 0 : index
    %c0_29 = arith.constant 0 : index
    %21 = vector.load %arg17[%c0_27, %c0_28, %c0_29] : memref<1x1x128xf32, #tpu.memory_space<vmem>>, vector<1x1x128xf32>
    %22 = vector.shape_cast %21 : vector<1x1x128xf32> to vector<1x128xf32>
    %c0_30 = arith.constant 0 : index
    %c0_31 = arith.constant 0 : index
    %c0_32 = arith.constant 0 : index
    %23 = vector.load %arg18[%c0_30, %c0_31, %c0_32] : memref<1x128x32xbf16, #tpu.memory_space<vmem>>, vector<1x128x32xbf16>
    %24 = vector.shape_cast %23 : vector<1x128x32xbf16> to vector<128x32xbf16>
    %c0_33 = arith.constant 0 : index
    %c0_34 = arith.constant 0 : index
    %c0_35 = arith.constant 0 : index
    %25 = vector.load %arg19[%c0_33, %c0_34, %c0_35] : memref<1x1x32xf32, #tpu.memory_space<vmem>>, vector<1x1x32xf32>
    %26 = vector.shape_cast %25 : vector<1x1x32xf32> to vector<1x32xf32>
    %c0_36 = arith.constant 0 : index
    %c0_37 = arith.constant 0 : index
    %c0_38 = arith.constant 0 : index
    %27 = vector.load %arg24[%c0_36, %c0_37, %c0_38] : memref<2x8x32xf32, #tpu.memory_space<vmem>>, vector<2x8x32xf32>
    %c0_39 = arith.constant 0 : index
    %c0_40 = arith.constant 0 : index
    %28 = vector.load %arg4[%c0_39, %c0_40] : memref<8x8xf32, #tpu.memory_space<vmem>>, vector<8x8xf32>
    %cst = arith.constant dense<0.000000e+00> : vector<2x8xf32>
    %29 = vector.multi_reduction <add>, %27, %cst [2] : vector<2x8x32xf32> to vector<2x8xf32>
    %30 = vector.shape_cast %29 : vector<2x8xf32> to vector<2x8x1xf32>
    %cst_41 = arith.constant 3.200000e+01 : f32
    %31 = vector.broadcast %cst_41 : f32 to vector<2x8x1xf32>
    %32 = arith.divf %30, %31 : vector<2x8x1xf32>
    %33 = vector.broadcast %32 : vector<2x8x1xf32> to vector<2x8x32xf32>
    %34 = arith.subf %27, %33 : vector<2x8x32xf32>
    %35 = arith.mulf %34, %34 : vector<2x8x32xf32>
    %cst_42 = arith.constant dense<0.000000e+00> : vector<2x8xf32>
    %36 = vector.multi_reduction <add>, %35, %cst_42 [2] : vector<2x8x32xf32> to vector<2x8xf32>
    %37 = vector.shape_cast %36 : vector<2x8xf32> to vector<2x8x1xf32>
    %cst_43 = arith.constant 3.200000e+01 : f32
    %38 = vector.broadcast %cst_43 : f32 to vector<2x8x1xf32>
    %39 = arith.divf %37, %38 : vector<2x8x1xf32>
    %40 = vector.broadcast %32 : vector<2x8x1xf32> to vector<2x8x32xf32>
    %41 = arith.subf %27, %40 : vector<2x8x32xf32>
    %cst_44 = arith.constant 9.99999974E-6 : f32
    %42 = vector.broadcast %cst_44 : f32 to vector<2x8x1xf32>
    %43 = arith.addf %39, %42 : vector<2x8x1xf32>
    %44 = math.rsqrt %43 : vector<2x8x1xf32>
    %45 = vector.broadcast %44 : vector<2x8x1xf32> to vector<2x8x32xf32>
    %46 = arith.mulf %41, %45 : vector<2x8x32xf32>
    %47 = vector.shape_cast %4 : vector<1x32xf32> to vector<1x1x32xf32>
    %48 = vector.broadcast %47 : vector<1x1x32xf32> to vector<2x8x32xf32>
    %49 = arith.mulf %46, %48 : vector<2x8x32xf32>
    %50 = vector.shape_cast %6 : vector<1x32xf32> to vector<1x1x32xf32>
    %51 = vector.broadcast %50 : vector<1x1x32xf32> to vector<2x8x32xf32>
    %52 = arith.addf %49, %51 : vector<2x8x32xf32>
    %53 = arith.truncf %52 : vector<2x8x32xf32> to vector<2x8x32xbf16>
    %cst_45 = arith.constant dense<0.000000e+00> : vector<2x8x96xf32>
    %54 = tpu.matmul %53, %8, %cst_45 {dimension_numbers = #tpu.dot_dimension_numbers<[2], [0], [0, 1], [1], [0, 0, 0, 1, 1, 1], [], []>} : vector<2x8x32xbf16>, vector<32x96xbf16>, vector<2x8x96xf32> -> vector<2x8x96xf32>
    %55 = vector.shape_cast %10 : vector<1x96xf32> to vector<1x1x96xf32>
    %56 = vector.broadcast %55 : vector<1x1x96xf32> to vector<2x8x96xf32>
    %57 = arith.addf %54, %56 : vector<2x8x96xf32>
    %cst_46 = arith.constant 0.000000e+00 : f32
    %58 = vector.broadcast %cst_46 : f32 to vector<2x8x32xf32>
    %59 = vector.extract_strided_slice %57 {offsets = [0, 0, 0], sizes = [2, 8, 16], strides = [1, 1, 1]} : vector<2x8x96xf32> to vector<2x8x16xf32>
    %cst_47 = arith.constant 2.500000e-01 : f32
    %60 = vector.broadcast %cst_47 : f32 to vector<2x8x16xf32>
    %61 = arith.mulf %59, %60 : vector<2x8x16xf32>
    %62 = arith.truncf %61 : vector<2x8x16xf32> to vector<2x8x16xbf16>
    %63 = vector.extract_strided_slice %57 {offsets = [0, 0, 32], sizes = [2, 8, 16], strides = [1, 1, 1]} : vector<2x8x96xf32> to vector<2x8x16xf32>
    %64 = arith.truncf %63 : vector<2x8x16xf32> to vector<2x8x16xbf16>
    %65 = vector.extract_strided_slice %57 {offsets = [0, 0, 64], sizes = [2, 8, 16], strides = [1, 1, 1]} : vector<2x8x96xf32> to vector<2x8x16xf32>
    %66 = arith.truncf %65 : vector<2x8x16xf32> to vector<2x8x16xbf16>
    "tpu.trace_start"() <{level = 10 : i32, message = "bqd,bkd->bqk"}> : () -> ()
    %cst_48 = arith.constant dense<0.000000e+00> : vector<2x8x8xf32>
    %67 = tpu.matmul %62, %64, %cst_48 {dimension_numbers = #tpu.dot_dimension_numbers<[2], [2], [1], [1], [0, 0, 0, 1, 1, 1], [0], [0]>} : vector<2x8x16xbf16>, vector<2x8x16xbf16>, vector<2x8x8xf32> -> vector<2x8x8xf32>
    "tpu.trace_stop"() : () -> ()
    %68 = vector.shape_cast %28 : vector<8x8xf32> to vector<1x8x8xf32>
    %69 = vector.broadcast %68 : vector<1x8x8xf32> to vector<2x8x8xf32>
    %70 = arith.addf %67, %69 : vector<2x8x8xf32>
    %cst_49 = arith.constant dense<0xFF800000> : vector<2x8xf32>
    %71 = vector.multi_reduction <maximumf>, %70, %cst_49 [2] : vector<2x8x8xf32> to vector<2x8xf32>
    %72 = vector.shape_cast %71 : vector<2x8xf32> to vector<2x8x1xf32>
    %73 = vector.broadcast %72 : vector<2x8x1xf32> to vector<2x8x8xf32>
    %74 = arith.subf %70, %73 : vector<2x8x8xf32>
    %75 = math.exp %74 : vector<2x8x8xf32>
    %cst_50 = arith.constant dense<0.000000e+00> : vector<2x8xf32>
    %76 = vector.multi_reduction <add>, %75, %cst_50 [2] : vector<2x8x8xf32> to vector<2x8xf32>
    %77 = vector.shape_cast %76 : vector<2x8xf32> to vector<2x8x1xf32>
    %78 = vector.broadcast %77 : vector<2x8x1xf32> to vector<2x8x8xf32>
    %79 = arith.divf %75, %78 : vector<2x8x8xf32>
    %80 = arith.truncf %79 : vector<2x8x8xf32> to vector<2x8x8xbf16>
    "tpu.trace_start"() <{level = 10 : i32, message = "bqk,bkd->bqd"}> : () -> ()
    %cst_51 = arith.constant dense<0.000000e+00> : vector<2x8x16xf32>
    %81 = tpu.matmul %80, %66, %cst_51 {dimension_numbers = #tpu.dot_dimension_numbers<[2], [1], [1], [2], [0, 0, 0, 1, 1, 2], [0], [0]>} : vector<2x8x8xbf16>, vector<2x8x16xbf16>, vector<2x8x16xf32> -> vector<2x8x16xf32>
    "tpu.trace_stop"() : () -> ()
    %82 = arith.truncf %81 : vector<2x8x16xf32> to vector<2x8x16xbf16>
    %83 = vector.extract_strided_slice %12 {offsets = [0, 0], sizes = [16, 32], strides = [1, 1]} : vector<32x32xbf16> to vector<16x32xbf16>
    %cst_52 = arith.constant dense<0.000000e+00> : vector<2x8x32xf32>
    %84 = tpu.matmul %82, %83, %cst_52 {dimension_numbers = #tpu.dot_dimension_numbers<[2], [0], [0, 1], [1], [0, 0, 0, 1, 1, 1], [], []>} : vector<2x8x16xbf16>, vector<16x32xbf16>, vector<2x8x32xf32> -> vector<2x8x32xf32>
    %85 = arith.addf %58, %84 : vector<2x8x32xf32>
    %86 = vector.extract_strided_slice %57 {offsets = [0, 0, 16], sizes = [2, 8, 16], strides = [1, 1, 1]} : vector<2x8x96xf32> to vector<2x8x16xf32>
    %cst_53 = arith.constant 2.500000e-01 : f32
    %87 = vector.broadcast %cst_53 : f32 to vector<2x8x16xf32>
    %88 = arith.mulf %86, %87 : vector<2x8x16xf32>
    %89 = arith.truncf %88 : vector<2x8x16xf32> to vector<2x8x16xbf16>
    %90 = vector.extract_strided_slice %57 {offsets = [0, 0, 48], sizes = [2, 8, 16], strides = [1, 1, 1]} : vector<2x8x96xf32> to vector<2x8x16xf32>
    %91 = arith.truncf %90 : vector<2x8x16xf32> to vector<2x8x16xbf16>
    %92 = vector.extract_strided_slice %57 {offsets = [0, 0, 80], sizes = [2, 8, 16], strides = [1, 1, 1]} : vector<2x8x96xf32> to vector<2x8x16xf32>
    %93 = arith.truncf %92 : vector<2x8x16xf32> to vector<2x8x16xbf16>
    "tpu.trace_start"() <{level = 10 : i32, message = "bqd,bkd->bqk"}> : () -> ()
    %cst_54 = arith.constant dense<0.000000e+00> : vector<2x8x8xf32>
    %94 = tpu.matmul %89, %91, %cst_54 {dimension_numbers = #tpu.dot_dimension_numbers<[2], [2], [1], [1], [0, 0, 0, 1, 1, 1], [0], [0]>} : vector<2x8x16xbf16>, vector<2x8x16xbf16>, vector<2x8x8xf32> -> vector<2x8x8xf32>
    "tpu.trace_stop"() : () -> ()
    %95 = vector.shape_cast %28 : vector<8x8xf32> to vector<1x8x8xf32>
    %96 = vector.broadcast %95 : vector<1x8x8xf32> to vector<2x8x8xf32>
    %97 = arith.addf %94, %96 : vector<2x8x8xf32>
    %cst_55 = arith.constant dense<0xFF800000> : vector<2x8xf32>
    %98 = vector.multi_reduction <maximumf>, %97, %cst_55 [2] : vector<2x8x8xf32> to vector<2x8xf32>
    %99 = vector.shape_cast %98 : vector<2x8xf32> to vector<2x8x1xf32>
    %100 = vector.broadcast %99 : vector<2x8x1xf32> to vector<2x8x8xf32>
    %101 = arith.subf %97, %100 : vector<2x8x8xf32>
    %102 = math.exp %101 : vector<2x8x8xf32>
    %cst_56 = arith.constant dense<0.000000e+00> : vector<2x8xf32>
    %103 = vector.multi_reduction <add>, %102, %cst_56 [2] : vector<2x8x8xf32> to vector<2x8xf32>
    %104 = vector.shape_cast %103 : vector<2x8xf32> to vector<2x8x1xf32>
    %105 = vector.broadcast %104 : vector<2x8x1xf32> to vector<2x8x8xf32>
    %106 = arith.divf %102, %105 : vector<2x8x8xf32>
    %107 = arith.truncf %106 : vector<2x8x8xf32> to vector<2x8x8xbf16>
    "tpu.trace_start"() <{level = 10 : i32, message = "bqk,bkd->bqd"}> : () -> ()
    %cst_57 = arith.constant dense<0.000000e+00> : vector<2x8x16xf32>
    %108 = tpu.matmul %107, %93, %cst_57 {dimension_numbers = #tpu.dot_dimension_numbers<[2], [1], [1], [2], [0, 0, 0, 1, 1, 2], [0], [0]>} : vector<2x8x8xbf16>, vector<2x8x16xbf16>, vector<2x8x16xf32> -> vector<2x8x16xf32>
    "tpu.trace_stop"() : () -> ()
    %109 = arith.truncf %108 : vector<2x8x16xf32> to vector<2x8x16xbf16>
    %110 = vector.extract_strided_slice %12 {offsets = [16, 0], sizes = [16, 32], strides = [1, 1]} : vector<32x32xbf16> to vector<16x32xbf16>
    %cst_58 = arith.constant dense<0.000000e+00> : vector<2x8x32xf32>
    %111 = tpu.matmul %109, %110, %cst_58 {dimension_numbers = #tpu.dot_dimension_numbers<[2], [0], [0, 1], [1], [0, 0, 0, 1, 1, 1], [], []>} : vector<2x8x16xbf16>, vector<16x32xbf16>, vector<2x8x32xf32> -> vector<2x8x32xf32>
    %112 = arith.addf %85, %111 : vector<2x8x32xf32>
    %113 = arith.addf %27, %112 : vector<2x8x32xf32>
    %114 = vector.shape_cast %14 : vector<1x32xf32> to vector<1x1x32xf32>
    %115 = vector.broadcast %114 : vector<1x1x32xf32> to vector<2x8x32xf32>
    %116 = arith.addf %113, %115 : vector<2x8x32xf32>
    %cst_59 = arith.constant dense<0.000000e+00> : vector<2x8xf32>
    %117 = vector.multi_reduction <add>, %116, %cst_59 [2] : vector<2x8x32xf32> to vector<2x8xf32>
    %118 = vector.shape_cast %117 : vector<2x8xf32> to vector<2x8x1xf32>
    %cst_60 = arith.constant 3.200000e+01 : f32
    %119 = vector.broadcast %cst_60 : f32 to vector<2x8x1xf32>
    %120 = arith.divf %118, %119 : vector<2x8x1xf32>
    %121 = vector.broadcast %120 : vector<2x8x1xf32> to vector<2x8x32xf32>
    %122 = arith.subf %116, %121 : vector<2x8x32xf32>
    %123 = arith.mulf %122, %122 : vector<2x8x32xf32>
    %cst_61 = arith.constant dense<0.000000e+00> : vector<2x8xf32>
    %124 = vector.multi_reduction <add>, %123, %cst_61 [2] : vector<2x8x32xf32> to vector<2x8xf32>
    %125 = vector.shape_cast %124 : vector<2x8xf32> to vector<2x8x1xf32>
    %cst_62 = arith.constant 3.200000e+01 : f32
    %126 = vector.broadcast %cst_62 : f32 to vector<2x8x1xf32>
    %127 = arith.divf %125, %126 : vector<2x8x1xf32>
    %128 = vector.broadcast %120 : vector<2x8x1xf32> to vector<2x8x32xf32>
    %129 = arith.subf %116, %128 : vector<2x8x32xf32>
    %cst_63 = arith.constant 9.99999974E-6 : f32
    %130 = vector.broadcast %cst_63 : f32 to vector<2x8x1xf32>
    %131 = arith.addf %127, %130 : vector<2x8x1xf32>
    %132 = math.rsqrt %131 : vector<2x8x1xf32>
    %133 = vector.broadcast %132 : vector<2x8x1xf32> to vector<2x8x32xf32>
    %134 = arith.mulf %129, %133 : vector<2x8x32xf32>
    %135 = vector.shape_cast %16 : vector<1x32xf32> to vector<1x1x32xf32>
    %136 = vector.broadcast %135 : vector<1x1x32xf32> to vector<2x8x32xf32>
    %137 = arith.mulf %134, %136 : vector<2x8x32xf32>
    %138 = vector.shape_cast %18 : vector<1x32xf32> to vector<1x1x32xf32>
    %139 = vector.broadcast %138 : vector<1x1x32xf32> to vector<2x8x32xf32>
    %140 = arith.addf %137, %139 : vector<2x8x32xf32>
    %141 = arith.truncf %140 : vector<2x8x32xf32> to vector<2x8x32xbf16>
    %cst_64 = arith.constant dense<0.000000e+00> : vector<2x8x128xf32>
    %142 = tpu.matmul %141, %20, %cst_64 {dimension_numbers = #tpu.dot_dimension_numbers<[2], [0], [0, 1], [1], [0, 0, 0, 1, 1, 1], [], []>} : vector<2x8x32xbf16>, vector<32x128xbf16>, vector<2x8x128xf32> -> vector<2x8x128xf32>
    %143 = vector.shape_cast %22 : vector<1x128xf32> to vector<1x1x128xf32>
    %144 = vector.broadcast %143 : vector<1x1x128xf32> to vector<2x8x128xf32>
    %145 = arith.addf %142, %144 : vector<2x8x128xf32>
    %cst_65 = arith.constant 1.702000e+00 : f32
    %146 = vector.broadcast %cst_65 : f32 to vector<2x8x128xf32>
    %147 = arith.mulf %146, %145 : vector<2x8x128xf32>
    %148 = arith.negf %147 : vector<2x8x128xf32>
    %149 = math.exp %148 : vector<2x8x128xf32>
    %cst_66 = arith.constant 1.000000e+00 : f32
    %150 = vector.broadcast %cst_66 : f32 to vector<2x8x128xf32>
    %151 = arith.addf %150, %149 : vector<2x8x128xf32>
    %152 = arith.divf %150, %151 : vector<2x8x128xf32>
    %153 = arith.mulf %145, %152 : vector<2x8x128xf32>
    %154 = arith.truncf %153 : vector<2x8x128xf32> to vector<2x8x128xbf16>
    %cst_67 = arith.constant dense<0.000000e+00> : vector<2x8x32xf32>
    %155 = tpu.matmul %154, %24, %cst_67 {dimension_numbers = #tpu.dot_dimension_numbers<[2], [0], [0, 1], [1], [0, 0, 0, 1, 1, 1], [], []>} : vector<2x8x128xbf16>, vector<128x32xbf16>, vector<2x8x32xf32> -> vector<2x8x32xf32>
    %156 = arith.addf %116, %155 : vector<2x8x32xf32>
    %157 = vector.shape_cast %26 : vector<1x32xf32> to vector<1x1x32xf32>
    %158 = vector.broadcast %157 : vector<1x1x32xf32> to vector<2x8x32xf32>
    %159 = arith.addf %156, %158 : vector<2x8x32xf32>
    %c0_68 = arith.constant 0 : index
    %c0_69 = arith.constant 0 : index
    %c0_70 = arith.constant 0 : index
    %160 = vector.load %arg24[%c0_68, %c0_69, %c0_70] : memref<2x8x32xf32, #tpu.memory_space<vmem>>, vector<2x8x32xf32>
    tpu.vector_store %arg24[%c0_68, %c0_69, %c0_70], %159 {strides = array<i32>} : memref<2x8x32xf32, #tpu.memory_space<vmem>>, vector<2x8x32xf32>,
    %c0_i32_71 = arith.constant 0 : i32
    %161 = arith.cmpi eq, %arg1, %c0_i32_71 : i32
    %162 = arith.extui %161 : i1 to i32
    %c0_i32_72 = arith.constant 0 : i32
    %163 = arith.cmpi ne, %162, %c0_i32_72 : i32
    scf.if %163 {
      %c0_73 = arith.constant 0 : index
      %c0_74 = arith.constant 0 : index
      %c0_75 = arith.constant 0 : index
      %164 = vector.load %arg24[%c0_73, %c0_74, %c0_75] : memref<2x8x32xf32, #tpu.memory_space<vmem>>, vector<2x8x32xf32>
      %165 = vector.extract_strided_slice %164 {offsets = [0, 0, 0], sizes = [2, 1, 32], strides = [1, 1, 1]} : vector<2x8x32xf32> to vector<2x1x32xf32>
      %166 = vector.shape_cast %165 : vector<2x1x32xf32> to vector<2x32xf32>
      %c0_76 = arith.constant 0 : index
      %c0_77 = arith.constant 0 : index
      %167 = vector.load %arg20[%c0_76, %c0_77] : memref<1x32xf32, #tpu.memory_space<vmem>>, vector<1x32xf32>
      %c0_78 = arith.constant 0 : index
      %c0_79 = arith.constant 0 : index
      %168 = vector.load %arg21[%c0_78, %c0_79] : memref<1x32xf32, #tpu.memory_space<vmem>>, vector<1x32xf32>
      %cst_80 = arith.constant dense<0.000000e+00> : vector<2xf32>
      %169 = vector.multi_reduction <add>, %166, %cst_80 [1] : vector<2x32xf32> to vector<2xf32>
      %170 = vector.shape_cast %169 : vector<2xf32> to vector<2x1xf32>
      %cst_81 = arith.constant 3.200000e+01 : f32
      %171 = vector.broadcast %cst_81 : f32 to vector<2x1xf32>
      %172 = arith.divf %170, %171 : vector<2x1xf32>
      %173 = vector.broadcast %172 : vector<2x1xf32> to vector<2x32xf32>
      %174 = arith.subf %166, %173 : vector<2x32xf32>
      %175 = arith.mulf %174, %174 : vector<2x32xf32>
      %cst_82 = arith.constant dense<0.000000e+00> : vector<2xf32>
      %176 = vector.multi_reduction <add>, %175, %cst_82 [1] : vector<2x32xf32> to vector<2xf32>
      %177 = vector.shape_cast %176 : vector<2xf32> to vector<2x1xf32>
      %cst_83 = arith.constant 3.200000e+01 : f32
      %178 = vector.broadcast %cst_83 : f32 to vector<2x1xf32>
      %179 = arith.divf %177, %178 : vector<2x1xf32>
      %180 = vector.broadcast %172 : vector<2x1xf32> to vector<2x32xf32>
      %181 = arith.subf %166, %180 : vector<2x32xf32>
      %cst_84 = arith.constant 9.99999974E-6 : f32
      %182 = vector.broadcast %cst_84 : f32 to vector<2x1xf32>
      %183 = arith.addf %179, %182 : vector<2x1xf32>
      %184 = math.rsqrt %183 : vector<2x1xf32>
      %185 = vector.broadcast %184 : vector<2x1xf32> to vector<2x32xf32>
      %186 = arith.mulf %181, %185 : vector<2x32xf32>
      %187 = vector.broadcast %167 : vector<1x32xf32> to vector<2x32xf32>
      %188 = arith.mulf %186, %187 : vector<2x32xf32>
      %189 = vector.broadcast %168 : vector<1x32xf32> to vector<2x32xf32>
      %190 = arith.addf %188, %189 : vector<2x32xf32>
      %191 = arith.truncf %190 : vector<2x32xf32> to vector<2x32xbf16>
      %c0_85 = arith.constant 0 : index
      %c0_86 = arith.constant 0 : index
      %192 = vector.load %arg22[%c0_85, %c0_86] : memref<32x32xbf16, #tpu.memory_space<vmem>>, vector<32x32xbf16>
      %cst_87 = arith.constant dense<0.000000e+00> : vector<2x32xf32>
      %193 = tpu.matmul %191, %192, %cst_87 {dimension_numbers = #tpu.dot_dimension_numbers<[1], [0], [0], [1], [0, 0, 1, 1], [], []>} : vector<2x32xbf16>, vector<32x32xbf16>, vector<2x32xf32> -> vector<2x32xf32>
      %194 = arith.mulf %193, %193 : vector<2x32xf32>
      %cst_88 = arith.constant dense<0.000000e+00> : vector<2xf32>
      %195 = vector.multi_reduction <add>, %194, %cst_88 [1] : vector<2x32xf32> to vector<2xf32>
      %196 = vector.shape_cast %195 : vector<2xf32> to vector<2x1xf32>
      %cst_89 = arith.constant 9.99999996E-13 : f32
      %197 = vector.broadcast %cst_89 : f32 to vector<2x1xf32>
      %198 = arith.addf %196, %197 : vector<2x1xf32>
      %199 = math.rsqrt %198 : vector<2x1xf32>
      %200 = vector.broadcast %199 : vector<2x1xf32> to vector<2x32xf32>
      %201 = arith.mulf %193, %200 : vector<2x32xf32>
      %c0_90 = arith.constant 0 : index
      %c0_91 = arith.constant 0 : index
      %202 = vector.load %arg23[%c0_90, %c0_91] : memref<2x32xf32, #tpu.memory_space<vmem>>, vector<2x32xf32>
      tpu.vector_store %arg23[%c0_90, %c0_91], %201 {strides = array<i32>} : memref<2x32xf32, #tpu.memory_space<vmem>>, vector<2x32xf32>,
    } else {
    }
    return
  }
  func.func @transform_0(%arg0: i32, %arg1: i32) -> (i32, i32, i32) {
    %c0_i32 = arith.constant 0 : i32
    %c0_i32_0 = arith.constant 0 : i32
    %c0_i32_1 = arith.constant 0 : i32
    return %arg0, %c0_i32, %c0_i32_0 : i32, i32, i32
  }
  func.func @transform_1(%arg0: i32, %arg1: i32) -> (i32, i32) {
    %c0_i32 = arith.constant 0 : i32
    %c0_i32_0 = arith.constant 0 : i32
    %c0_i32_1 = arith.constant 0 : i32
    return %c0_i32, %c0_i32_0 : i32, i32
  }
  func.func @transform_2(%arg0: i32, %arg1: i32) -> (i32, i32) {
    %c0_i32 = arith.constant 0 : i32
    %c0_i32_0 = arith.constant 0 : i32
    %c0_i32_1 = arith.constant 0 : i32
    return %c0_i32, %c0_i32_0 : i32, i32
  }
  func.func @transform_3(%arg0: i32, %arg1: i32) -> (i32, i32) {
    %c0_i32 = arith.constant 0 : i32
    %c0_i32_0 = arith.constant 0 : i32
    %c0_i32_1 = arith.constant 0 : i32
    return %c0_i32, %c0_i32_0 : i32, i32
  }
  func.func @transform_4(%arg0: i32, %arg1: i32) -> (i32, i32) {
    %c0_i32 = arith.constant 0 : i32
    %c0_i32_0 = arith.constant 0 : i32
    %c0_i32_1 = arith.constant 0 : i32
    return %c0_i32, %c0_i32_0 : i32, i32
  }
  func.func @transform_5(%arg0: i32, %arg1: i32) -> (i32, i32) {
    %c0_i32 = arith.constant 0 : i32
    %c0_i32_0 = arith.constant 0 : i32
    %c0_i32_1 = arith.constant 0 : i32
    return %c0_i32, %c0_i32_0 : i32, i32
  }
  func.func @transform_6(%arg0: i32, %arg1: i32) -> (i32, i32, i32) {
    %c0_i32 = arith.constant 0 : i32
    %c0_i32_0 = arith.constant 0 : i32
    %c0_i32_1 = arith.constant 0 : i32
    return %arg1, %c0_i32, %c0_i32_0 : i32, i32, i32
  }
  func.func @transform_7(%arg0: i32, %arg1: i32) -> (i32, i32, i32) {
    %c0_i32 = arith.constant 0 : i32
    %c0_i32_0 = arith.constant 0 : i32
    %c0_i32_1 = arith.constant 0 : i32
    return %arg1, %c0_i32, %c0_i32_0 : i32, i32, i32
  }
  func.func @transform_8(%arg0: i32, %arg1: i32) -> (i32, i32, i32) {
    %c0_i32 = arith.constant 0 : i32
    %c0_i32_0 = arith.constant 0 : i32
    %c0_i32_1 = arith.constant 0 : i32
    return %arg1, %c0_i32, %c0_i32_0 : i32, i32, i32
  }
  func.func @transform_9(%arg0: i32, %arg1: i32) -> (i32, i32, i32) {
    %c0_i32 = arith.constant 0 : i32
    %c0_i32_0 = arith.constant 0 : i32
    %c0_i32_1 = arith.constant 0 : i32
    return %arg1, %c0_i32, %c0_i32_0 : i32, i32, i32
  }
  func.func @transform_10(%arg0: i32, %arg1: i32) -> (i32, i32, i32) {
    %c0_i32 = arith.constant 0 : i32
    %c0_i32_0 = arith.constant 0 : i32
    %c0_i32_1 = arith.constant 0 : i32
    return %arg1, %c0_i32, %c0_i32_0 : i32, i32, i32
  }
  func.func @transform_11(%arg0: i32, %arg1: i32) -> (i32, i32, i32) {
    %c0_i32 = arith.constant 0 : i32
    %c0_i32_0 = arith.constant 0 : i32
    %c0_i32_1 = arith.constant 0 : i32
    return %arg1, %c0_i32, %c0_i32_0 : i32, i32, i32
  }
  func.func @transform_12(%arg0: i32, %arg1: i32) -> (i32, i32, i32) {
    %c0_i32 = arith.constant 0 : i32
    %c0_i32_0 = arith.constant 0 : i32
    %c0_i32_1 = arith.constant 0 : i32
    return %arg1, %c0_i32, %c0_i32_0 : i32, i32, i32
  }
  func.func @transform_13(%arg0: i32, %arg1: i32) -> (i32, i32, i32) {
    %c0_i32 = arith.constant 0 : i32
    %c0_i32_0 = arith.constant 0 : i32
    %c0_i32_1 = arith.constant 0 : i32
    return %arg1, %c0_i32, %c0_i32_0 : i32, i32, i32
  }
  func.func @transform_14(%arg0: i32, %arg1: i32) -> (i32, i32, i32) {
    %c0_i32 = arith.constant 0 : i32
    %c0_i32_0 = arith.constant 0 : i32
    %c0_i32_1 = arith.constant 0 : i32
    return %arg1, %c0_i32, %c0_i32_0 : i32, i32, i32
  }
  func.func @transform_15(%arg0: i32, %arg1: i32) -> (i32, i32, i32) {
    %c0_i32 = arith.constant 0 : i32
    %c0_i32_0 = arith.constant 0 : i32
    %c0_i32_1 = arith.constant 0 : i32
    return %arg1, %c0_i32, %c0_i32_0 : i32, i32, i32
  }
  func.func @transform_16(%arg0: i32, %arg1: i32) -> (i32, i32, i32) {
    %c0_i32 = arith.constant 0 : i32
    %c0_i32_0 = arith.constant 0 : i32
    %c0_i32_1 = arith.constant 0 : i32
    return %arg1, %c0_i32, %c0_i32_0 : i32, i32, i32
  }
  func.func @transform_17(%arg0: i32, %arg1: i32) -> (i32, i32, i32) {
    %c0_i32 = arith.constant 0 : i32
    %c0_i32_0 = arith.constant 0 : i32
    %c0_i32_1 = arith.constant 0 : i32
    return %arg1, %c0_i32, %c0_i32_0 : i32, i32, i32
  }
  func.func @transform_18(%arg0: i32, %arg1: i32) -> (i32, i32) {
    %c0_i32 = arith.constant 0 : i32
    %c0_i32_0 = arith.constant 0 : i32
    %c0_i32_1 = arith.constant 0 : i32
    return %c0_i32, %c0_i32_0 : i32, i32
  }
  func.func @transform_19(%arg0: i32, %arg1: i32) -> (i32, i32) {
    %c0_i32 = arith.constant 0 : i32
    %c0_i32_0 = arith.constant 0 : i32
    %c0_i32_1 = arith.constant 0 : i32
    return %c0_i32, %c0_i32_0 : i32, i32
  }
  func.func @transform_20(%arg0: i32, %arg1: i32) -> (i32, i32) {
    %c0_i32 = arith.constant 0 : i32
    %c0_i32_0 = arith.constant 0 : i32
    %c0_i32_1 = arith.constant 0 : i32
    return %c0_i32, %c0_i32_0 : i32, i32
  }
  func.func @transform_21(%arg0: i32, %arg1: i32) -> (i32, i32) {
    %c0_i32 = arith.constant 0 : i32
    %c0_i32_0 = arith.constant 0 : i32
    return %arg0, %c0_i32 : i32, i32
  }
}

</mosaic_0001>

<llo_original>
// kernel: tpu_custom_call.1
$region0: #{tpu_custom_call.1}
  #allocation0 [shape = 'u32[]', space=smem, size = 0x4, offset = 0x4, fixed_abs, tag = 'smem constant byte address 0x4 - core index']
  #allocation1 [shape = 'u32[144,128]{1,0:T(1,128)}', space=vmem, size = 0x12000, scoped, tag = 'internal scratch']
  %s0 = inlined_call_operand.hbm [shape: f32[8,128], index: 0, kind: input, shape index: {}]
  %s1 = inlined_call_operand.hbm [shape: f32[8,128], index: 1, kind: output, shape index: {}]
  %s2 = sld [smem:[#allocation0]]
  $region18: #{tpu_custom_call.1} parent=0
    _
  %s4 = ssub.s32 1, %s2
  %s5 = scalar_select 0, %s4, %s2
  $region1: #{tpu_custom_call.1} parent=0
    #allocation2 [shape = 'u8[4096]{0}', space=vmem, size = 0x1000, scoped, tag = 'input window, operand 0, single buffered']
    #allocation3 [shape = 's32[1]{0}', space=sflag, size = 0x4, scoped, tag = 'scoped memory for tpu_custom_call.1']
    #allocation4 [shape = 's32[1]{0}', space=sflag, size = 0x4, scoped, tag = 'scoped memory for tpu_custom_call.1']
    #allocation5 [shape = 'u8[4096]{0}', space=vmem, size = 0x1000, scoped, tag = 'output window, operand 0, single buffered']
    %6 = vsyncpa [#allocation3], 0
    %7 = vsyncpa [#allocation4], 0
    // Predicated region
    $region2: #{tpu_custom_call.1} parent=1 // pred_check
      _
    $region3: #{tpu_custom_call.1} parent=1 // pred_check_branch
      %9 = sbr.rel (0) target = $region5
    $region4: #{tpu_custom_call.1} parent=1 // pred_region
      %s11 = ssub.s32 128, 128
      %12 = vsyncadd [#allocation3], %s11
      %s14 = sshll.u32 [#allocation2], 4
      %s15 = int_to_ptr.vmem [resolvable:$true] %s14
      %17 = dma.hbm_to_vmem [thread:$0]  %s0, 128, %s15, [#allocation3]
    $region5: #{tpu_custom_call.1} parent=1 // pred_fallthru
      _
    // Predicated region
    $region6: #{tpu_custom_call.1} parent=1 // pred_check
      _
    $region7: #{tpu_custom_call.1} parent=1 // pred_check_branch
      %19 = sbr.rel (0) target = $region9
    $region8: #{tpu_custom_call.1} parent=1 // pred_region
      %20 = dma.done [#allocation3], 128
    $region9: #{tpu_custom_call.1} parent=1 // pred_fallthru
      _
    %v21 = vld [vmem:[#allocation2] sm:$0xff]
    %22 = vst [vmem:[#allocation5] sm:$0xff] %v21
    // Predicated region
    $region10: #{tpu_custom_call.1} parent=1 // pred_check
      _
    $region11: #{tpu_custom_call.1} parent=1 // pred_check_branch
      %24 = sbr.rel (0) target = $region13
    $region12: #{tpu_custom_call.1} parent=1 // pred_region
      %s26 = ssub.s32 128, 128
      %27 = vsyncadd [#allocation4], %s26
      %s29 = sshll.u32 [#allocation5], 4
      %s30 = int_to_ptr.vmem [resolvable:$true] %s29
      %32 = dma.vmem_to_hbm [thread:$0]  %s30, 128, %s1, [#allocation4]
    $region13: #{tpu_custom_call.1} parent=1 // pred_fallthru
      _
    // Predicated region
    $region14: #{tpu_custom_call.1} parent=1 // pred_check
      _
    $region15: #{tpu_custom_call.1} parent=1 // pred_check_branch
      %34 = sbr.rel (0) target = $region17
    $region16: #{tpu_custom_call.1} parent=1 // pred_region
      %35 = dma.done [#allocation4], 128
    $region17: #{tpu_custom_call.1} parent=1 // pred_fallthru
      _
    %36 = vsyncpa [#allocation3], 1
    %37 = vsyncpa [#allocation4], 1

// kernel: tpu_custom_call.1
$region0: #{tpu_custom_call.1}
  #allocation0 [shape = 'u32[]', space=smem, size = 0x4, offset = 0x4, fixed_abs, tag = 'smem constant byte address 0x4 - core index']
  #allocation1 [shape = 'u32[144,128]{1,0:T(1,128)}', space=vmem, size = 0x12000, scoped, tag = 'internal scratch']
  #allocation2 [shape = 'f32[2,8,32]{2,1,0:T(8,128)}', space=vmem, size = 0x2000, scoped, tag = 'scratch operand']
  %s0 = inlined_call_operand.vmem [shape: bf16[2,8,192], index: 0, kind: input, shape index: {}]
  %s1 = inlined_call_operand.vmem [shape: f32[8,32], index: 1, kind: input, shape index: {}]
  %s2 = inlined_call_operand.vmem [shape: f32[8,8], index: 2, kind: input, shape index: {}]
  %s3 = inlined_call_operand.vmem [shape: bf16[192,32], index: 3, kind: input, shape index: {}]
  %s4 = inlined_call_operand.vmem [shape: f32[1,32], index: 4, kind: input, shape index: {}]
  %s5 = inlined_call_operand.vmem [shape: f32[1,32], index: 5, kind: input, shape index: {}]
  %s6 = inlined_call_operand.vmem [shape: f32[1,1,32], index: 6, kind: input, shape index: {}]
  %s7 = inlined_call_operand.vmem [shape: f32[1,1,32], index: 7, kind: input, shape index: {}]
  %s8 = inlined_call_operand.vmem [shape: bf16[1,32,96], index: 8, kind: input, shape index: {}]
  %s9 = inlined_call_operand.vmem [shape: f32[1,1,96], index: 9, kind: input, shape index: {}]
  %s10 = inlined_call_operand.vmem [shape: bf16[1,32,32], index: 10, kind: input, shape index: {}]
  %s11 = inlined_call_operand.vmem [shape: f32[1,1,32], index: 11, kind: input, shape index: {}]
  %s12 = inlined_call_operand.vmem [shape: f32[1,1,32], index: 12, kind: input, shape index: {}]
  %s13 = inlined_call_operand.vmem [shape: f32[1,1,32], index: 13, kind: input, shape index: {}]
  %s14 = inlined_call_operand.vmem [shape: bf16[1,32,128], index: 14, kind: input, shape index: {}]
  %s15 = inlined_call_operand.vmem [shape: f32[1,1,128], index: 15, kind: input, shape index: {}]
  %s16 = inlined_call_operand.vmem [shape: bf16[1,128,32], index: 16, kind: input, shape index: {}]
  %s17 = inlined_call_operand.vmem [shape: f32[1,1,32], index: 17, kind: input, shape index: {}]
  %s18 = inlined_call_operand.vmem [shape: f32[1,32], index: 18, kind: input, shape index: {}]
  %s19 = inlined_call_operand.vmem [shape: f32[1,32], index: 19, kind: input, shape index: {}]
  %s20 = inlined_call_operand.vmem [shape: bf16[32,32], index: 20, kind: input, shape index: {}]
  %s21 = inlined_call_operand.hbm [shape: f32[2,32], index: 21, kind: output, shape index: {}]
  %s22 = sld [smem:[#allocation0]]
  $region102: #{tpu_custom_call.1} parent=0
    _
  %s24 = ssub.s32 1, %s22
  %s25 = scalar_select 0, %s24, %s22
  $region1: #{tpu_custom_call.1} parent=0
    #allocation3 [shape = 'u8[1024]{0}', space=vmem, size = 0x400, scoped, tag = 'output window, operand 0, single buffered']
    #allocation4 [shape = 's32[1]{0}', space=sflag, size = 0x4, scoped, tag = 'scoped memory for tpu_custom_call.1']
    %26 = vsyncpa [#allocation4], 0
    // Predicated region
    $region2: #{tpu_custom_call.1} parent=1 // pred_check
      _
    $region3: #{tpu_custom_call.1} parent=1 // pred_check_branch
      %28 = sbr.rel (0) target = $region5
    $region4: #{tpu_custom_call.1} parent=1 // pred_region
      _
    $region5: #{tpu_custom_call.1} parent=1 // pred_fallthru
      _
    // Predicated region
    $region6: #{tpu_custom_call.1} parent=1 // pred_check
      _
    $region7: #{tpu_custom_call.1} parent=1 // pred_check_branch
      %30 = sbr.rel (0) target = $region9
    $region8: #{tpu_custom_call.1} parent=1 // pred_region
      _
    $region9: #{tpu_custom_call.1} parent=1 // pred_fallthru
      _
    // Predicated region
    $region10: #{tpu_custom_call.1} parent=1 // pred_check
      _
    $region11: #{tpu_custom_call.1} parent=1 // pred_check_branch
      %32 = sbr.rel (0) target = $region13
    $region12: #{tpu_custom_call.1} parent=1 // pred_region
      _
    $region13: #{tpu_custom_call.1} parent=1 // pred_fallthru
      _
    // Predicated region
    $region14: #{tpu_custom_call.1} parent=1 // pred_check
      _
    $region15: #{tpu_custom_call.1} parent=1 // pred_check_branch
      %34 = sbr.rel (0) target = $region17
    $region16: #{tpu_custom_call.1} parent=1 // pred_region
      _
    $region17: #{tpu_custom_call.1} parent=1 // pred_fallthru
      _
    // Predicated region
    $region18: #{tpu_custom_call.1} parent=1 // pred_check
      _
    $region19: #{tpu_custom_call.1} parent=1 // pred_check_branch
      %36 = sbr.rel (0) target = $region21
    $region20: #{tpu_custom_call.1} parent=1 // pred_region
      _
    $region21: #{tpu_custom_call.1} parent=1 // pred_fallthru
      _
    // Predicated region
    $region22: #{tpu_custom_call.1} parent=1 // pred_check
      _
    $region23: #{tpu_custom_call.1} parent=1 // pred_check_branch
      %38 = sbr.rel (0) target = $region25
    $region24: #{tpu_custom_call.1} parent=1 // pred_region
      _
    $region25: #{tpu_custom_call.1} parent=1 // pred_fallthru
      _
    // Predicated region
    $region26: #{tpu_custom_call.1} parent=1 // pred_check
      _
    $region27: #{tpu_custom_call.1} parent=1 // pred_check_branch
      %40 = sbr.rel (0) target = $region29
    $region28: #{tpu_custom_call.1} parent=1 // pred_region
      _
    $region29: #{tpu_custom_call.1} parent=1 // pred_fallthru
      _
    // Predicated region
    $region30: #{tpu_custom_call.1} parent=1 // pred_check
      _
    $region31: #{tpu_custom_call.1} parent=1 // pred_check_branch
      %42 = sbr.rel (0) target = $region33
    $region32: #{tpu_custom_call.1} parent=1 // pred_region
      _
    $region33: #{tpu_custom_call.1} parent=1 // pred_fallthru
      _
    // Predicated region
    $region34: #{tpu_custom_call.1} parent=1 // pred_check
      _
    $region35: #{tpu_custom_call.1} parent=1 // pred_check_branch
      %44 = sbr.rel (0) target = $region37
    $region36: #{tpu_custom_call.1} parent=1 // pred_region
      _
    $region37: #{tpu_custom_call.1} parent=1 // pred_fallthru
      _
    // Predicated region
    $region38: #{tpu_custom_call.1} parent=1 // pred_check
      _
    $region39: #{tpu_custom_call.1} parent=1 // pred_check_branch
      %46 = sbr.rel (0) target = $region41
    $region40: #{tpu_custom_call.1} parent=1 // pred_region
      _
    $region41: #{tpu_custom_call.1} parent=1 // pred_fallthru
      _
    // Predicated region
    $region42: #{tpu_custom_call.1} parent=1 // pred_check
      _
    $region43: #{tpu_custom_call.1} parent=1 // pred_check_branch
      %48 = sbr.rel (0) target = $region45
    $region44: #{tpu_custom_call.1} parent=1 // pred_region
      _
    $region45: #{tpu_custom_call.1} parent=1 // pred_fallthru
      _
    // Predicated region
    $region46: #{tpu_custom_call.1} parent=1 // pred_check
      _
    $region47: #{tpu_custom_call.1} parent=1 // pred_check_branch
      %50 = sbr.rel (0) target = $region49
    $region48: #{tpu_custom_call.1} parent=1 // pred_region
      _
    $region49: #{tpu_custom_call.1} parent=1 // pred_fallthru
      _
    // Predicated region
    $region50: #{tpu_custom_call.1} parent=1 // pred_check
      _
    $region51: #{tpu_custom_call.1} parent=1 // pred_check_branch
      %52 = sbr.rel (0) target = $region53
    $region52: #{tpu_custom_call.1} parent=1 // pred_region
      _
    $region53: #{tpu_custom_call.1} parent=1 // pred_fallthru
      _
    // Predicated region
    $region54: #{tpu_custom_call.1} parent=1 // pred_check
      _
    $region55: #{tpu_custom_call.1} parent=1 // pred_check_branch
      %54 = sbr.rel (0) target = $region57
    $region56: #{tpu_custom_call.1} parent=1 // pred_region
      _
    $region57: #{tpu_custom_call.1} parent=1 // pred_fallthru
      _
    // Predicated region
    $region58: #{tpu_custom_call.1} parent=1 // pred_check
      _
    $region59: #{tpu_custom_call.1} parent=1 // pred_check_branch
      %56 = sbr.rel (0) target = $region61
    $region60: #{tpu_custom_call.1} parent=1 // pred_region
      _
    $region61: #{tpu_custom_call.1} parent=1 // pred_fallthru
      _
    // Predicated region
    $region62: #{tpu_custom_call.1} parent=1 // pred_check
      _
    $region63: #{tpu_custom_call.1} parent=1 // pred_check_branch
      %58 = sbr.rel (0) target = $region65
    $region64: #{tpu_custom_call.1} parent=1 // pred_region
      _
    $region65: #{tpu_custom_call.1} parent=1 // pred_fallthru
      _
    // Predicated region
    $region66: #{tpu_custom_call.1} parent=1 // pred_check
      _
    $region67: #{tpu_custom_call.1} parent=1 // pred_check_branch
      %60 = sbr.rel (0) target = $region69
    $region68: #{tpu_custom_call.1} parent=1 // pred_region
      _
    $region69: #{tpu_custom_call.1} parent=1 // pred_fallthru
      _
    // Predicated region
    $region70: #{tpu_custom_call.1} parent=1 // pred_check
      _
    $region71: #{tpu_custom_call.1} parent=1 // pred_check_branch
      %62 = sbr.rel (0) target = $region73
    $region72: #{tpu_custom_call.1} parent=1 // pred_region
      _
    $region73: #{tpu_custom_call.1} parent=1 // pred_fallthru
      _
    // Predicated region
    $region74: #{tpu_custom_call.1} parent=1 // pred_check
      _
    $region75: #{tpu_custom_call.1} parent=1 // pred_check_branch
      %64 = sbr.rel (0) target = $region77
    $region76: #{tpu_custom_call.1} parent=1 // pred_region
      _
    $region77: #{tpu_custom_call.1} parent=1 // pred_fallthru
      _
    // Predicated region
    $region78: #{tpu_custom_call.1} parent=1 // pred_check
      _
    $region79: #{tpu_custom_call.1} parent=1 // pred_check_branch
      %66 = sbr.rel (0) target = $region81
    $region80: #{tpu_custom_call.1} parent=1 // pred_region
      _
    $region81: #{tpu_custom_call.1} parent=1 // pred_fallthru
      _
    // Predicated region
    $region82: #{tpu_custom_call.1} parent=1 // pred_check
      _
    $region83: #{tpu_custom_call.1} parent=1 // pred_check_branch
      %68 = sbr.rel (0) target = $region85
    $region84: #{tpu_custom_call.1} parent=1 // pred_region
      _
    $region85: #{tpu_custom_call.1} parent=1 // pred_fallthru
      _
    %p70 = scmp.eq.s32.totalorder 0, 0
    // Predicated region
    $region86: #{tpu_custom_call.1} parent=1 // pred_check
      %p71 = pneg %p70
    $region87: #{tpu_custom_call.1} parent=1 // pred_check_branch
      %73 = sbr.rel (%p71) target = $region89
    $region88: #{tpu_custom_call.1} parent=1 // pred_region
      %v74 = vld [vmem:[%s0] sm:$0xff]
      %v75 = vld [vmem:[%s0 + $0x8] sm:$0xff]
      %v76 = vld [vmem:[%s3] sm:$0xf]
      %v77 = vld [vmem:[%s3 + $0x4] sm:$0xf]
      %v78 = vld [vmem:[%s3 + $0x8] sm:$0xf]
      %v79 = vld [vmem:[%s3 + $0xc] sm:$0xf]
      %v80 = vld [vmem:[%s3 + $0x10] sm:$0xf]
      %v81 = vld [vmem:[%s3 + $0x14] sm:$0xf]
      %v82 = vld [vmem:[%s3 + $0x18] sm:$0xf]
      %v83 = vld [vmem:[%s3 + $0x1c] sm:$0xf]
      %v84 = vld [vmem:[%s3 + $0x20] sm:$0xf]
      %v85 = vld [vmem:[%s3 + $0x24] sm:$0xf]
      %v86 = vld [vmem:[%s3 + $0x28] sm:$0xf]
      %v87 = vld [vmem:[%s3 + $0x2c] sm:$0xf]
      %v88 = vld [vmem:[%s3 + $0x30] sm:$0xf]
      %v89 = vld [vmem:[%s3 + $0x34] sm:$0xf]
      %v90 = vld [vmem:[%s3 + $0x38] sm:$0xf]
      %v91 = vld [vmem:[%s3 + $0x3c] sm:$0xf]
      %v92 = vld [vmem:[%s3 + $0x40] sm:$0xf]
      %v93 = vld [vmem:[%s3 + $0x44] sm:$0xf]
      %v94 = vld [vmem:[%s3 + $0x48] sm:$0xf]
      %v95 = vld [vmem:[%s3 + $0x4c] sm:$0xf]
      %v96 = vld [vmem:[%s3 + $0x50] sm:$0xf]
      %v97 = vld [vmem:[%s3 + $0x54] sm:$0xf]
      %v98 = vld [vmem:[%s3 + $0x58] sm:$0xf]
      %v99 = vld [vmem:[%s3 + $0x5c] sm:$0xf]
      %v100 = vld [vmem:[%s1] sm:$0xff]
      %v103 = vunpack.c.l.b16 %v74
      %v104 = vunpack.c.h.b16 %v74
      %v105 = vunpack.c.l.b16 %v75
      %v106 = vunpack.c.h.b16 %v75
      %v107 = vpack.c.b16 %v105, %v103
      %v108 = vpack.c.b16 %v106, %v104
      %v134 = vunpack.c.l.b16 %v76
      %v135 = vunpack.c.l.b16 %v77
      %v136 = vunpack.c.l.b16 %v78
      %v137 = vunpack.c.l.b16 %v79
      %v138 = vunpack.c.l.b16 %v80
      %v139 = vunpack.c.l.b16 %v81
      %v140 = vunpack.c.l.b16 %v82
      %v141 = vunpack.c.l.b16 %v83
      %v142 = vunpack.c.l.b16 %v84
      %v143 = vunpack.c.l.b16 %v85
      %v144 = vunpack.c.l.b16 %v86
      %v145 = vunpack.c.l.b16 %v87
      %v146 = vunpack.c.l.b16 %v88
      %v147 = vunpack.c.l.b16 %v89
      %v148 = vunpack.c.l.b16 %v90
      %v149 = vunpack.c.l.b16 %v91
      %v150 = vunpack.c.l.b16 %v92
      %v151 = vunpack.c.l.b16 %v93
      %v152 = vunpack.c.l.b16 %v94
      %v153 = vunpack.c.l.b16 %v95
      %v154 = vunpack.c.l.b16 %v96
      %v155 = vunpack.c.l.b16 %v97
      %v156 = vunpack.c.l.b16 %v98
      %v157 = vunpack.c.l.b16 %v99
      %v158 = vpack.c.b16 %v135, %v134
      %v159 = vpack.c.b16 %v137, %v136
      %v160 = vpack.c.b16 %v139, %v138
      %v161 = vpack.c.b16 %v141, %v140
      %v162 = vpack.c.b16 %v143, %v142
      %v163 = vpack.c.b16 %v145, %v144
      %v164 = vpack.c.b16 %v147, %v146
      %v165 = vpack.c.b16 %v149, %v148
      %v166 = vpack.c.b16 %v151, %v150
      %v167 = vpack.c.b16 %v153, %v152
      %v168 = vpack.c.b16 %v155, %v154
      %v169 = vpack.c.b16 %v157, %v156
      %vm182 = vcmask 523264
      %v184 = vsel %vm182, %v108, 0
      %186 = vmatprep.subr.bf16.mxu0 0
      %187 = vmatpush1.bf16.msra.mxu0 %v158
      %188 = vmatprep.subr.bf16.mxu0 0
      %189 = vmatpush1.bf16.msra.mxu0 %v159
      %190 = vmatprep.subr.bf16.mxu0 0
      %191 = vmatpush1.bf16.msra.mxu0 %v160
      %192 = vmatprep.subr.bf16.mxu0 0
      %193 = vmatpush1.bf16.msra.mxu0 %v161
      %194 = vmatprep.subr.bf16.mxu0 0
      %195 = vmatpush1.bf16.msra.mxu0 %v162
      %196 = vmatprep.subr.bf16.mxu0 0
      %197 = vmatpush1.bf16.msra.mxu0 %v163
      %198 = vmatprep.subr.bf16.mxu0 0
      %199 = vmatpush1.bf16.msra.mxu0 %v164
      %200 = vmatprep.subr.bf16.mxu0 0
      %201 = vmatpush1.bf16.msra.mxu0 %v165
      %202 = vmatprep.subr.bf16.mxu0 0
      %203 = vmatpush1.bf16.msra.mxu0 %v166
      %204 = vmatprep.subr.bf16.mxu0 0
      %205 = vmatpush1.bf16.msra.mxu0 %v167
      %206 = vmatprep.subr.bf16.mxu0 0
      %207 = vmatpush1.bf16.msra.mxu0 %v168
      %208 = vmatprep.subr.bf16.mxu0 0
      %209 = vmatpush1.bf16.msra.mxu0 %v169
      %210 = vmatprep.subr.bf16.mxu0 0
      %211 = vmatpush1.bf16.msra.mxu0 0
      %212 = vmatprep.subr.bf16.mxu0 0
      %213 = vmatpush1.bf16.msra.mxu0 0
      %214 = vmatprep.subr.bf16.mxu0 0
      %215 = vmatpush1.bf16.msra.mxu0 0
      %216 = vmatprep.subr.bf16.mxu0 0
      %217 = vmatpush1.bf16.msra.mxu0 0
      %218 = vmatprep.mubr.bf16.mxu0 %v184
      %219 = vmatmul.mubr.bf16.gmra.mrb[0].mxu0 %v107
      %v220 = vpop.f32.mrb[0].mxu0
      %v221 = vadd.f32 %v100, %v220
      %v222 = vpop.f32.mrb[0].mxu0
      %v223 = vpop.f32.mrb[0].mxu0
      %v224 = vadd.f32 %v100, %v223
      %v225 = vpop.f32.mrb[0].mxu0
      %226 = vdwg.mxu0
      %v227 = vld [vmem:[%s4] sm:$0x1]
      %v228 = vld [vmem:[%s5] sm:$0x1]
      %vm229 = vcmask 261120
      %v230 = vsel %vm229, %v221, 0.0
      %231 = vadd.xlane.f32.xlu0 %v230
      %v232 = vpop.xlane.xlu0 %231
      %v233 = vsel %vm229, %v224, 0.0
      %234 = vadd.xlane.f32.xlu0 %v233
      %v235 = vpop.xlane.xlu0 %234
      %v236 = vrcp.pop 32.0
      %v237 = vmul.f32 %v232, %v236
      %v238 = vmul.f32 %v235, %v236
      %v239 = vsub.f32 %v221, %v237
      %v240 = vsub.f32 %v224, %v238
      %v241 = vmul.f32 %v239, %v239
      %v242 = vmul.f32 %v240, %v240
      %v243 = vsel %vm229, %v241, 0.0
      %244 = vadd.xlane.f32.xlu0 %v243
      %v245 = vpop.xlane.xlu0 %244
      %v246 = vsel %vm229, %v242, 0.0
      %247 = vadd.xlane.f32.xlu0 %v246
      %v248 = vpop.xlane.xlu0 %247
      %v249 = vmul.f32 %v245, %v236
      %v250 = vmul.f32 %v248, %v236
      %v251 = vadd.f32 %v249, 1e-05
      %v252 = vadd.f32 %v250, 1e-05
      %v253 = vrsqrt.pop %v251
      %v254 = vrsqrt.pop %v252
      %v255 = vmul.f32 %v239, %v253
      %v256 = vmul.f32 %v240, %v254
      %v258 = vlaneseq
      %v259 = vshrl.u32 %v258, 7
      %v260 = vsub.s32 0, %v259
      %v261 = vrot.slane %v227, %v260
      %v263 = vmul.f32 %v255, %v261
      %v264 = vmul.f32 %v256, %v261
      %v266 = vlaneseq
      %v267 = vshrl.u32 %v266, 7
      %v268 = vsub.s32 0, %v267
      %v269 = vrot.slane %v228, %v268
      %v271 = vadd.f32 %v263, %v269
      %v272 = vadd.f32 %v264, %v269
      %273 = vst.msk [vmem:[#allocation2] sm:$0xff] %vm229, %v271
      %274 = vst.msk [vmem:[#allocation2 + $0x8] sm:$0xff] %vm229, %v272
    $region89: #{tpu_custom_call.1} parent=1 // pred_fallthru
      _
    %v275 = vld [vmem:[%s6] sm:$0x1]
    %v276 = vld [vmem:[%s7] sm:$0x1]
    %v277 = vld [vmem:[%s8] sm:$0xf]
    %v278 = vld [vmem:[%s8 + $0x4] sm:$0xf]
    %v279 = vld [vmem:[%s8 + $0x8] sm:$0xf]
    %v280 = vld [vmem:[%s8 + $0xc] sm:$0xf]
    %v281 = vld [vmem:[%s9] sm:$0x1]
    %v282 = vld [vmem:[%s10] sm:$0xf]
    %v283 = vld [vmem:[%s10 + $0x4] sm:$0xf]
    %v284 = vld [vmem:[%s10 + $0x8] sm:$0xf]
    %v285 = vld [vmem:[%s10 + $0xc] sm:$0xf]
    %v286 = vld [vmem:[%s11] sm:$0x1]
    %v287 = vld [vmem:[%s12] sm:$0x1]
    %v288 = vld [vmem:[%s13] sm:$0x1]
    %v289 = vld [vmem:[%s14] sm:$0xf]
    %v290 = vld [vmem:[%s14 + $0x4] sm:$0xf]
    %v291 = vld [vmem:[%s14 + $0x8] sm:$0xf]
    %v292 = vld [vmem:[%s14 + $0xc] sm:$0xf]
    %v293 = vld [vmem:[%s15] sm:$0x1]
    %v294 = vld [vmem:[%s16] sm:$0xf]
    %v295 = vld [vmem:[%s16 + $0x4] sm:$0xf]
    %v296 = vld [vmem:[%s16 + $0x8] sm:$0xf]
    %v297 = vld [vmem:[%s16 + $0xc] sm:$0xf]
    %v298 = vld [vmem:[%s16 + $0x10] sm:$0xf]
    %v299 = vld [vmem:[%s16 + $0x14] sm:$0xf]
    %v300 = vld [vmem:[%s16 + $0x18] sm:$0xf]
    %v301 = vld [vmem:[%s16 + $0x1c] sm:$0xf]
    %v302 = vld [vmem:[%s16 + $0x20] sm:$0xf]
    %v303 = vld [vmem:[%s16 + $0x24] sm:$0xf]
    %v304 = vld [vmem:[%s16 + $0x28] sm:$0xf]
    %v305 = vld [vmem:[%s16 + $0x2c] sm:$0xf]
    %v306 = vld [vmem:[%s16 + $0x30] sm:$0xf]
    %v307 = vld [vmem:[%s16 + $0x34] sm:$0xf]
    %v308 = vld [vmem:[%s16 + $0x38] sm:$0xf]
    %v309 = vld [vmem:[%s16 + $0x3c] sm:$0xf]
    %v310 = vld [vmem:[%s17] sm:$0x1]
    %v311 = vld [vmem:[#allocation2] sm:$0xff]
    %v312 = vld [vmem:[#allocation2 + $0x8] sm:$0xff]
    %v313 = vld [vmem:[%s2] sm:$0xff]
    %vm314 = vcmask 261120
    %v315 = vsel %vm314, %v311, 0.0
    %316 = vadd.xlane.f32.xlu0 %v315
    %v317 = vpop.xlane.xlu0 %316
    %v318 = vsel %vm314, %v312, 0.0
    %319 = vadd.xlane.f32.xlu0 %v318
    %v320 = vpop.xlane.xlu0 %319
    %v321 = vrcp.pop 32.0
    %v322 = vmul.f32 %v317, %v321
    %v323 = vmul.f32 %v320, %v321
    %v324 = vsub.f32 %v311, %v322
    %v325 = vsub.f32 %v312, %v323
    %v326 = vmul.f32 %v324, %v324
    %v327 = vmul.f32 %v325, %v325
    %v328 = vsel %vm314, %v326, 0.0
    %329 = vadd.xlane.f32.xlu0 %v328
    %v330 = vpop.xlane.xlu0 %329
    %v331 = vsel %vm314, %v327, 0.0
    %332 = vadd.xlane.f32.xlu0 %v331
    %v333 = vpop.xlane.xlu0 %332
    %v334 = vmul.f32 %v330, %v321
    %v335 = vmul.f32 %v333, %v321
    %v336 = vadd.f32 %v334, 1e-05
    %v337 = vadd.f32 %v335, 1e-05
    %v338 = vrsqrt.pop %v336
    %v339 = vrsqrt.pop %v337
    %v340 = vmul.f32 %v324, %v338
    %v341 = vmul.f32 %v325, %v339
    %v343 = vlaneseq
    %v344 = vshrl.u32 %v343, 7
    %v345 = vsub.s32 0, %v344
    %v346 = vrot.slane %v275, %v345
    %v348 = vmul.f32 %v340, %v346
    %v349 = vmul.f32 %v341, %v346
    %v351 = vlaneseq
    %v352 = vshrl.u32 %v351, 7
    %v353 = vsub.s32 0, %v352
    %v354 = vrot.slane %v276, %v353
    %v356 = vadd.f32 %v348, %v354
    %v357 = vadd.f32 %v349, %v354
    %v358 = vpack.c.bf16 %v356, %v356
    %v359 = vpack.c.bf16 %v357, %v357
    %v361 = vlaneseq
    %v362 = vshrl.u32 %v361, 7
    %v363 = vsub.s32 0, %v362
    %v364 = vrot.slane %v281, %v363
    %v368 = vunpack.c.l.b16 %v358
    %v369 = vunpack.c.l.b16 %v359
    %v370 = vpack.c.b16 %v369, %v368
    %v375 = vunpack.c.l.b16 %v277
    %v376 = vunpack.c.l.b16 %v278
    %v377 = vunpack.c.l.b16 %v279
    %v378 = vunpack.c.l.b16 %v280
    %v379 = vpack.c.b16 %v376, %v375
    %v380 = vpack.c.b16 %v378, %v377
    %v384 = vsel %vm314, %v370, 0
    %386 = vmatprep.subr.bf16.mxu0 0
    %387 = vmatpush1.bf16.msra.mxu0 %v379
    %388 = vmatprep.subr.bf16.mxu0 0
    %389 = vmatpush1.bf16.msra.mxu0 %v380
    %390 = vmatprep.subr.bf16.mxu0 0
    %391 = vmatpush1.bf16.msra.mxu0 0
    %392 = vmatprep.subr.bf16.mxu0 0
    %393 = vmatpush1.bf16.msra.mxu0 0
    %394 = vmatprep.subr.bf16.mxu0 0
    %395 = vmatpush1.bf16.msra.mxu0 0
    %396 = vmatprep.subr.bf16.mxu0 0
    %397 = vmatpush1.bf16.msra.mxu0 0
    %398 = vmatprep.subr.bf16.mxu0 0
    %399 = vmatpush1.bf16.msra.mxu0 0
    %400 = vmatprep.subr.bf16.mxu0 0
    %401 = vmatpush1.bf16.msra.mxu0 0
    %402 = vmatprep.subr.bf16.mxu0 0
    %403 = vmatpush1.bf16.msra.mxu0 0
    %404 = vmatprep.subr.bf16.mxu0 0
    %405 = vmatpush1.bf16.msra.mxu0 0
    %406 = vmatprep.subr.bf16.mxu0 0
    %407 = vmatpush1.bf16.msra.mxu0 0
    %408 = vmatprep.subr.bf16.mxu0 0
    %409 = vmatpush1.bf16.msra.mxu0 0
    %410 = vmatprep.subr.bf16.mxu0 0
    %411 = vmatpush1.bf16.msra.mxu0 0
    %412 = vmatprep.subr.bf16.mxu0 0
    %413 = vmatpush1.bf16.msra.mxu0 0
    %414 = vmatprep.subr.bf16.mxu0 0
    %415 = vmatpush1.bf16.msra.mxu0 0
    %416 = vmatprep.subr.bf16.mxu0 0
    %417 = vmatpush1.bf16.msra.mxu0 0
    %418 = vmatprep.mubr.bf16.mxu0 0
    %419 = vmatmul.mubr.bf16.gmra.mrb[0].mxu0 %v384
    %v420 = vpop.f32.mrb[0].mxu0
    %v421 = vadd.f32 %v364, %v420
    %v422 = vpop.f32.mrb[0].mxu0
    %v423 = vpop.f32.mrb[0].mxu0
    %v424 = vadd.f32 %v364, %v423
    %v425 = vpop.f32.mrb[0].mxu0
    %426 = vdwg.mxu0
    %v427 = vmul.f32 %v421, 0.25
    %v428 = vmul.f32 %v424, 0.25
    %v429 = vpack.c.bf16 %v427, %v427
    %v430 = vpack.c.bf16 %v428, %v428
    %v431 = vpack.c.bf16 %v421, %v421
    %v432 = vpack.c.bf16 %v424, %v424
    %434 = vrot.lane.b32.xlu0 %v431, 96
    %v435 = vpop.permute.xlu0 %434
    %vm436 = vcmask 130048
    %v438 = vsel %vm436, %v429, 0
    %v441 = vsel %vm436, %v435, 0
    %443 = vmatprep.subr.bf16.mxu0 0
    %444 = vmatpush1.bf16.xpose.msra.mxu0 %v441
    %445 = vmatprep.subr.bf16.mxu0 0
    %446 = vmatpush1.bf16.xpose.msra.mxu0 0
    %447 = vmatprep.subr.bf16.mxu0 0
    %448 = vmatpush1.bf16.xpose.msra.mxu0 0
    %449 = vmatprep.subr.bf16.mxu0 0
    %450 = vmatpush1.bf16.xpose.msra.mxu0 0
    %451 = vmatprep.subr.bf16.mxu0 0
    %452 = vmatpush1.bf16.xpose.msra.mxu0 0
    %453 = vmatprep.subr.bf16.mxu0 0
    %454 = vmatpush1.bf16.xpose.msra.mxu0 0
    %455 = vmatprep.subr.bf16.mxu0 0
    %456 = vmatpush1.bf16.xpose.msra.mxu0 0
    %457 = vmatprep.subr.bf16.mxu0 0
    %458 = vmatpush1.bf16.xpose.msra.mxu0 0
    %459 = vmatprep.subr.bf16.mxu0 0
    %460 = vmatpush1.bf16.xpose.msra.mxu0 0
    %461 = vmatprep.subr.bf16.mxu0 0
    %462 = vmatpush1.bf16.xpose.msra.mxu0 0
    %463 = vmatprep.subr.bf16.mxu0 0
    %464 = vmatpush1.bf16.xpose.msra.mxu0 0
    %465 = vmatprep.subr.bf16.mxu0 0
    %466 = vmatpush1.bf16.xpose.msra.mxu0 0
    %467 = vmatprep.subr.bf16.mxu0 0
    %468 = vmatpush1.bf16.xpose.msra.mxu0 0
    %469 = vmatprep.subr.bf16.mxu0 0
    %470 = vmatpush1.bf16.xpose.msra.mxu0 0
    %471 = vmatprep.subr.bf16.mxu0 0
    %472 = vmatpush1.bf16.xpose.msra.mxu0 0
    %473 = vmatprep.subr.bf16.mxu0 0
    %474 = vmatpush1.bf16.xpose.msra.mxu0 0
    %475 = vmatprep.mubr.bf16.mxu0 0
    %476 = vmatmul.mubr.bf16.gmra.mrb[0].mxu0 %v438
    %v477 = vpop.f32.mrb[0].mxu0
    %v478 = vadd.f32 %v313, %v477
    %v479 = vpop.f32.mrb[0].mxu0
    %v480 = vpop.f32.mrb[0].mxu0
    %v481 = vpop.f32.mrb[0].mxu0
    %482 = vdwg.mxu0
    %484 = vrot.lane.b32.xlu0 %v432, 96
    %v485 = vpop.permute.xlu0 %484
    %v487 = vsel %vm436, %v430, 0
    %v490 = vsel %vm436, %v485, 0
    %492 = vmatprep.subr.bf16.mxu0 0
    %493 = vmatpush1.bf16.xpose.msra.mxu0 %v490
    %494 = vmatprep.subr.bf16.mxu0 0
    %495 = vmatpush1.bf16.xpose.msra.mxu0 0
    %496 = vmatprep.subr.bf16.mxu0 0
    %497 = vmatpush1.bf16.xpose.msra.mxu0 0
    %498 = vmatprep.subr.bf16.mxu0 0
    %499 = vmatpush1.bf16.xpose.msra.mxu0 0
    %500 = vmatprep.subr.bf16.mxu0 0
    %501 = vmatpush1.bf16.xpose.msra.mxu0 0
    %502 = vmatprep.subr.bf16.mxu0 0
    %503 = vmatpush1.bf16.xpose.msra.mxu0 0
    %504 = vmatprep.subr.bf16.mxu0 0
    %505 = vmatpush1.bf16.xpose.msra.mxu0 0
    %506 = vmatprep.subr.bf16.mxu0 0
    %507 = vmatpush1.bf16.xpose.msra.mxu0 0
    %508 = vmatprep.subr.bf16.mxu0 0
    %509 = vmatpush1.bf16.xpose.msra.mxu0 0
    %510 = vmatprep.subr.bf16.mxu0 0
    %511 = vmatpush1.bf16.xpose.msra.mxu0 0
    %512 = vmatprep.subr.bf16.mxu0 0
    %513 = vmatpush1.bf16.xpose.msra.mxu0 0
    %514 = vmatprep.subr.bf16.mxu0 0
    %515 = vmatpush1.bf16.xpose.msra.mxu0 0
    %516 = vmatprep.subr.bf16.mxu0 0
    %517 = vmatpush1.bf16.xpose.msra.mxu0 0
    %518 = vmatprep.subr.bf16.mxu0 0
    %519 = vmatpush1.bf16.xpose.msra.mxu0 0
    %520 = vmatprep.subr.bf16.mxu0 0
    %521 = vmatpush1.bf16.xpose.msra.mxu0 0
    %522 = vmatprep.subr.bf16.mxu0 0
    %523 = vmatpush1.bf16.xpose.msra.mxu0 0
    %524 = vmatprep.mubr.bf16.mxu0 0
    %525 = vmatmul.mubr.bf16.gmra.mrb[0].mxu0 %v487
    %v526 = vpop.f32.mrb[0].mxu0
    %v527 = vadd.f32 %v313, %v526
    %v528 = vpop.f32.mrb[0].mxu0
    %v529 = vpop.f32.mrb[0].mxu0
    %v530 = vpop.f32.mrb[0].mxu0
    %531 = vdwg.mxu0
    %vm532 = vcmask 64512
    %v533 = vsel %vm532, %v478, -inf
    %534 = vmax.xlane.f32.xlu0 %v533
    %v535 = vpop.xlane.xlu0 %534
    %v536 = vsel %vm532, %v527, -inf
    %537 = vmax.xlane.f32.xlu0 %v536
    %v538 = vpop.xlane.xlu0 %537
    %v539 = vsub.f32 %v478, %v535
    %v540 = vsub.f32 %v527, %v538
    %v541 = vmul.f32 %v539, 1.442695
    %v542 = vpow.pop %v541
    %v543 = vmul.f32 %v540, 1.442695
    %v544 = vpow.pop %v543
    %v545 = vsel %vm532, %v542, 0.0
    %546 = vadd.xlane.f32.xlu0 %v545
    %v547 = vpop.xlane.xlu0 %546
    %v548 = vsel %vm532, %v544, 0.0
    %549 = vadd.xlane.f32.xlu0 %v548
    %v550 = vpop.xlane.xlu0 %549
    %v551 = vrcp.pop %v547
    %v552 = vmul.f32 %v542, %v551
    %v553 = vrcp.pop %v550
    %v554 = vmul.f32 %v544, %v553
    %v555 = vpack.c.bf16 %v552, %v552
    %v556 = vpack.c.bf16 %v554, %v554
    %557 = vrot.lane.b32.xlu0 %v431, 64
    %v558 = vpop.permute.xlu0 %557
    %v560 = vsel %vm532, %v555, 0
    %vm562 = vcmask 1043456
    %v564 = vsel %vm562, %v558, 0
    %566 = vmatprep.subr.bf16.mxu0 0
    %567 = vmatpush1.bf16.msra.mxu0 %v564
    %568 = vmatprep.subr.bf16.mxu0 0
    %569 = vmatpush1.bf16.msra.mxu0 0
    %570 = vmatprep.subr.bf16.mxu0 0
    %571 = vmatpush1.bf16.msra.mxu0 0
    %572 = vmatprep.subr.bf16.mxu0 0
    %573 = vmatpush1.bf16.msra.mxu0 0
    %574 = vmatprep.subr.bf16.mxu0 0
    %575 = vmatpush1.bf16.msra.mxu0 0
    %576 = vmatprep.subr.bf16.mxu0 0
    %577 = vmatpush1.bf16.msra.mxu0 0
    %578 = vmatprep.subr.bf16.mxu0 0
    %579 = vmatpush1.bf16.msra.mxu0 0
    %580 = vmatprep.subr.bf16.mxu0 0
    %581 = vmatpush1.bf16.msra.mxu0 0
    %582 = vmatprep.subr.bf16.mxu0 0
    %583 = vmatpush1.bf16.msra.mxu0 0
    %584 = vmatprep.subr.bf16.mxu0 0
    %585 = vmatpush1.bf16.msra.mxu0 0
    %586 = vmatprep.subr.bf16.mxu0 0
    %587 = vmatpush1.bf16.msra.mxu0 0
    %588 = vmatprep.subr.bf16.mxu0 0
    %589 = vmatpush1.bf16.msra.mxu0 0
    %590 = vmatprep.subr.bf16.mxu0 0
    %591 = vmatpush1.bf16.msra.mxu0 0
    %592 = vmatprep.subr.bf16.mxu0 0
    %593 = vmatpush1.bf16.msra.mxu0 0
    %594 = vmatprep.subr.bf16.mxu0 0
    %595 = vmatpush1.bf16.msra.mxu0 0
    %596 = vmatprep.subr.bf16.mxu0 0
    %597 = vmatpush1.bf16.msra.mxu0 0
    %598 = vmatprep.mubr.bf16.mxu0 0
    %599 = vmatmul.mubr.bf16.gmra.mrb[0].mxu0 %v560
    %v600 = vpop.f32.mrb[0].mxu0
    %v601 = vadd.f32 0.0, %v600
    %v602 = vpop.f32.mrb[0].mxu0
    %v603 = vpop.f32.mrb[0].mxu0
    %v604 = vpop.f32.mrb[0].mxu0
    %605 = vdwg.mxu0
    %606 = vrot.lane.b32.xlu0 %v432, 64
    %v607 = vpop.permute.xlu0 %606
    %v609 = vsel %vm532, %v556, 0
    %v612 = vsel %vm562, %v607, 0
    %614 = vmatprep.subr.bf16.mxu0 0
    %615 = vmatpush1.bf16.msra.mxu0 %v612
    %616 = vmatprep.subr.bf16.mxu0 0
    %617 = vmatpush1.bf16.msra.mxu0 0
    %618 = vmatprep.subr.bf16.mxu0 0
    %619 = vmatpush1.bf16.msra.mxu0 0
    %620 = vmatprep.subr.bf16.mxu0 0
    %621 = vmatpush1.bf16.msra.mxu0 0
    %622 = vmatprep.subr.bf16.mxu0 0
    %623 = vmatpush1.bf16.msra.mxu0 0
    %624 = vmatprep.subr.bf16.mxu0 0
    %625 = vmatpush1.bf16.msra.mxu0 0
    %626 = vmatprep.subr.bf16.mxu0 0
    %627 = vmatpush1.bf16.msra.mxu0 0
    %628 = vmatprep.subr.bf16.mxu0 0
    %629 = vmatpush1.bf16.msra.mxu0 0
    %630 = vmatprep.subr.bf16.mxu0 0
    %631 = vmatpush1.bf16.msra.mxu0 0
    %632 = vmatprep.subr.bf16.mxu0 0
    %633 = vmatpush1.bf16.msra.mxu0 0
    %634 = vmatprep.subr.bf16.mxu0 0
    %635 = vmatpush1.bf16.msra.mxu0 0
    %636 = vmatprep.subr.bf16.mxu0 0
    %637 = vmatpush1.bf16.msra.mxu0 0
    %638 = vmatprep.subr.bf16.mxu0 0
    %639 = vmatpush1.bf16.msra.mxu0 0
    %640 = vmatprep.subr.bf16.mxu0 0
    %641 = vmatpush1.bf16.msra.mxu0 0
    %642 = vmatprep.subr.bf16.mxu0 0
    %643 = vmatpush1.bf16.msra.mxu0 0
    %644 = vmatprep.subr.bf16.mxu0 0
    %645 = vmatpush1.bf16.msra.mxu0 0
    %646 = vmatprep.mubr.bf16.mxu0 0
    %647 = vmatmul.mubr.bf16.gmra.mrb[0].mxu0 %v609
    %v648 = vpop.f32.mrb[0].mxu0
    %v649 = vadd.f32 0.0, %v648
    %v650 = vpop.f32.mrb[0].mxu0
    %v651 = vpop.f32.mrb[0].mxu0
    %v652 = vpop.f32.mrb[0].mxu0
    %653 = vdwg.mxu0
    %v654 = vpack.c.bf16 %v601, %v601
    %v655 = vpack.c.bf16 %v649, %v649
    %657 = vrot.lane.b32.xlu0 %v429, 112
    %v658 = vpop.permute.xlu0 %657
    %659 = vrot.lane.b32.xlu0 %v431, 80
    %v660 = vpop.permute.xlu0 %659
    %v662 = vsel %vm436, %v658, 0
    %v665 = vsel %vm436, %v660, 0
    %667 = vmatprep.subr.bf16.mxu0 0
    %668 = vmatpush1.bf16.xpose.msra.mxu0 %v665
    %669 = vmatprep.subr.bf16.mxu0 0
    %670 = vmatpush1.bf16.xpose.msra.mxu0 0
    %671 = vmatprep.subr.bf16.mxu0 0
    %672 = vmatpush1.bf16.xpose.msra.mxu0 0
    %673 = vmatprep.subr.bf16.mxu0 0
    %674 = vmatpush1.bf16.xpose.msra.mxu0 0
    %675 = vmatprep.subr.bf16.mxu0 0
    %676 = vmatpush1.bf16.xpose.msra.mxu0 0
    %677 = vmatprep.subr.bf16.mxu0 0
    %678 = vmatpush1.bf16.xpose.msra.mxu0 0
    %679 = vmatprep.subr.bf16.mxu0 0
    %680 = vmatpush1.bf16.xpose.msra.mxu0 0
    %681 = vmatprep.subr.bf16.mxu0 0
    %682 = vmatpush1.bf16.xpose.msra.mxu0 0
    %683 = vmatprep.subr.bf16.mxu0 0
    %684 = vmatpush1.bf16.xpose.msra.mxu0 0
    %685 = vmatprep.subr.bf16.mxu0 0
    %686 = vmatpush1.bf16.xpose.msra.mxu0 0
    %687 = vmatprep.subr.bf16.mxu0 0
    %688 = vmatpush1.bf16.xpose.msra.mxu0 0
    %689 = vmatprep.subr.bf16.mxu0 0
    %690 = vmatpush1.bf16.xpose.msra.mxu0 0
    %691 = vmatprep.subr.bf16.mxu0 0
    %692 = vmatpush1.bf16.xpose.msra.mxu0 0
    %693 = vmatprep.subr.bf16.mxu0 0
    %694 = vmatpush1.bf16.xpose.msra.mxu0 0
    %695 = vmatprep.subr.bf16.mxu0 0
    %696 = vmatpush1.bf16.xpose.msra.mxu0 0
    %697 = vmatprep.subr.bf16.mxu0 0
    %698 = vmatpush1.bf16.xpose.msra.mxu0 0
    %699 = vmatprep.mubr.bf16.mxu0 0
    %700 = vmatmul.mubr.bf16.gmra.mrb[0].mxu0 %v662
    %v701 = vpop.f32.mrb[0].mxu0
    %v702 = vadd.f32 %v313, %v701
    %v703 = vpop.f32.mrb[0].mxu0
    %v704 = vpop.f32.mrb[0].mxu0
    %v705 = vpop.f32.mrb[0].mxu0
    %706 = vdwg.mxu0
    %708 = vrot.lane.b32.xlu0 %v430, 112
    %v709 = vpop.permute.xlu0 %708
    %710 = vrot.lane.b32.xlu0 %v432, 80
    %v711 = vpop.permute.xlu0 %710
    %v713 = vsel %vm436, %v709, 0
    %v716 = vsel %vm436, %v711, 0
    %718 = vmatprep.subr.bf16.mxu0 0
    %719 = vmatpush1.bf16.xpose.msra.mxu0 %v716
    %720 = vmatprep.subr.bf16.mxu0 0
    %721 = vmatpush1.bf16.xpose.msra.mxu0 0
    %722 = vmatprep.subr.bf16.mxu0 0
    %723 = vmatpush1.bf16.xpose.msra.mxu0 0
    %724 = vmatprep.subr.bf16.mxu0 0
    %725 = vmatpush1.bf16.xpose.msra.mxu0 0
    %726 = vmatprep.subr.bf16.mxu0 0
    %727 = vmatpush1.bf16.xpose.msra.mxu0 0
    %728 = vmatprep.subr.bf16.mxu0 0
    %729 = vmatpush1.bf16.xpose.msra.mxu0 0
    %730 = vmatprep.subr.bf16.mxu0 0
    %731 = vmatpush1.bf16.xpose.msra.mxu0 0
    %732 = vmatprep.subr.bf16.mxu0 0
    %733 = vmatpush1.bf16.xpose.msra.mxu0 0
    %734 = vmatprep.subr.bf16.mxu0 0
    %735 = vmatpush1.bf16.xpose.msra.mxu0 0
    %736 = vmatprep.subr.bf16.mxu0 0
    %737 = vmatpush1.bf16.xpose.msra.mxu0 0
    %738 = vmatprep.subr.bf16.mxu0 0
    %739 = vmatpush1.bf16.xpose.msra.mxu0 0
    %740 = vmatprep.subr.bf16.mxu0 0
    %741 = vmatpush1.bf16.xpose.msra.mxu0 0
    %742 = vmatprep.subr.bf16.mxu0 0
    %743 = vmatpush1.bf16.xpose.msra.mxu0 0
    %744 = vmatprep.subr.bf16.mxu0 0
    %745 = vmatpush1.bf16.xpose.msra.mxu0 0
    %746 = vmatprep.subr.bf16.mxu0 0
    %747 = vmatpush1.bf16.xpose.msra.mxu0 0
    %748 = vmatprep.subr.bf16.mxu0 0
    %749 = vmatpush1.bf16.xpose.msra.mxu0 0
    %750 = vmatprep.mubr.bf16.mxu0 0
    %751 = vmatmul.mubr.bf16.gmra.mrb[0].mxu0 %v713
    %v752 = vpop.f32.mrb[0].mxu0
    %v753 = vadd.f32 %v313, %v752
    %v754 = vpop.f32.mrb[0].mxu0
    %v755 = vpop.f32.mrb[0].mxu0
    %v756 = vpop.f32.mrb[0].mxu0
    %757 = vdwg.mxu0
    %v758 = vsel %vm532, %v702, -inf
    %759 = vmax.xlane.f32.xlu0 %v758
    %v760 = vpop.xlane.xlu0 %759
    %v761 = vsel %vm532, %v753, -inf
    %762 = vmax.xlane.f32.xlu0 %v761
    %v763 = vpop.xlane.xlu0 %762
    %v764 = vsub.f32 %v702, %v760
    %v765 = vsub.f32 %v753, %v763
    %v766 = vmul.f32 %v764, 1.442695
    %v767 = vpow.pop %v766
    %v768 = vmul.f32 %v765, 1.442695
    %v769 = vpow.pop %v768
    %v770 = vsel %vm532, %v767, 0.0
    %771 = vadd.xlane.f32.xlu0 %v770
    %v772 = vpop.xlane.xlu0 %771
    %v773 = vsel %vm532, %v769, 0.0
    %774 = vadd.xlane.f32.xlu0 %v773
    %v775 = vpop.xlane.xlu0 %774
    %v776 = vrcp.pop %v772
    %v777 = vmul.f32 %v767, %v776
    %v778 = vrcp.pop %v775
    %v779 = vmul.f32 %v769, %v778
    %v780 = vpack.c.bf16 %v777, %v777
    %v781 = vpack.c.bf16 %v779, %v779
    %782 = vrot.lane.b32.xlu0 %v431, 48
    %v783 = vpop.permute.xlu0 %782
    %v785 = vsel %vm532, %v780, 0
    %v788 = vsel %vm562, %v783, 0
    %790 = vmatprep.subr.bf16.mxu0 0
    %791 = vmatpush1.bf16.msra.mxu0 %v788
    %792 = vmatprep.subr.bf16.mxu0 0
    %793 = vmatpush1.bf16.msra.mxu0 0
    %794 = vmatprep.subr.bf16.mxu0 0
    %795 = vmatpush1.bf16.msra.mxu0 0
    %796 = vmatprep.subr.bf16.mxu0 0
    %797 = vmatpush1.bf16.msra.mxu0 0
    %798 = vmatprep.subr.bf16.mxu0 0
    %799 = vmatpush1.bf16.msra.mxu0 0
    %800 = vmatprep.subr.bf16.mxu0 0
    %801 = vmatpush1.bf16.msra.mxu0 0
    %802 = vmatprep.subr.bf16.mxu0 0
    %803 = vmatpush1.bf16.msra.mxu0 0
    %804 = vmatprep.subr.bf16.mxu0 0
    %805 = vmatpush1.bf16.msra.mxu0 0
    %806 = vmatprep.subr.bf16.mxu0 0
    %807 = vmatpush1.bf16.msra.mxu0 0
    %808 = vmatprep.subr.bf16.mxu0 0
    %809 = vmatpush1.bf16.msra.mxu0 0
    %810 = vmatprep.subr.bf16.mxu0 0
    %811 = vmatpush1.bf16.msra.mxu0 0
    %812 = vmatprep.subr.bf16.mxu0 0
    %813 = vmatpush1.bf16.msra.mxu0 0
    %814 = vmatprep.subr.bf16.mxu0 0
    %815 = vmatpush1.bf16.msra.mxu0 0
    %816 = vmatprep.subr.bf16.mxu0 0
    %817 = vmatpush1.bf16.msra.mxu0 0
    %818 = vmatprep.subr.bf16.mxu0 0
    %819 = vmatpush1.bf16.msra.mxu0 0
    %820 = vmatprep.subr.bf16.mxu0 0
    %821 = vmatpush1.bf16.msra.mxu0 0
    %822 = vmatprep.mubr.bf16.mxu0 0
    %823 = vmatmul.mubr.bf16.gmra.mrb[0].mxu0 %v785
    %v824 = vpop.f32.mrb[0].mxu0
    %v825 = vadd.f32 0.0, %v824
    %v826 = vpop.f32.mrb[0].mxu0
    %v827 = vpop.f32.mrb[0].mxu0
    %v828 = vpop.f32.mrb[0].mxu0
    %829 = vdwg.mxu0
    %830 = vrot.lane.b32.xlu0 %v432, 48
    %v831 = vpop.permute.xlu0 %830
    %v833 = vsel %vm532, %v781, 0
    %v836 = vsel %vm562, %v831, 0
    %838 = vmatprep.subr.bf16.mxu0 0
    %839 = vmatpush1.bf16.msra.mxu0 %v836
    %840 = vmatprep.subr.bf16.mxu0 0
    %841 = vmatpush1.bf16.msra.mxu0 0
    %842 = vmatprep.subr.bf16.mxu0 0
    %843 = vmatpush1.bf16.msra.mxu0 0
    %844 = vmatprep.subr.bf16.mxu0 0
    %845 = vmatpush1.bf16.msra.mxu0 0
    %846 = vmatprep.subr.bf16.mxu0 0
    %847 = vmatpush1.bf16.msra.mxu0 0
    %848 = vmatprep.subr.bf16.mxu0 0
    %849 = vmatpush1.bf16.msra.mxu0 0
    %850 = vmatprep.subr.bf16.mxu0 0
    %851 = vmatpush1.bf16.msra.mxu0 0
    %852 = vmatprep.subr.bf16.mxu0 0
    %853 = vmatpush1.bf16.msra.mxu0 0
    %854 = vmatprep.subr.bf16.mxu0 0
    %855 = vmatpush1.bf16.msra.mxu0 0
    %856 = vmatprep.subr.bf16.mxu0 0
    %857 = vmatpush1.bf16.msra.mxu0 0
    %858 = vmatprep.subr.bf16.mxu0 0
    %859 = vmatpush1.bf16.msra.mxu0 0
    %860 = vmatprep.subr.bf16.mxu0 0
    %861 = vmatpush1.bf16.msra.mxu0 0
    %862 = vmatprep.subr.bf16.mxu0 0
    %863 = vmatpush1.bf16.msra.mxu0 0
    %864 = vmatprep.subr.bf16.mxu0 0
    %865 = vmatpush1.bf16.msra.mxu0 0
    %866 = vmatprep.subr.bf16.mxu0 0
    %867 = vmatpush1.bf16.msra.mxu0 0
    %868 = vmatprep.subr.bf16.mxu0 0
    %869 = vmatpush1.bf16.msra.mxu0 0
    %870 = vmatprep.mubr.bf16.mxu0 0
    %871 = vmatmul.mubr.bf16.gmra.mrb[0].mxu0 %v833
    %v872 = vpop.f32.mrb[0].mxu0
    %v873 = vadd.f32 0.0, %v872
    %v874 = vpop.f32.mrb[0].mxu0
    %v875 = vpop.f32.mrb[0].mxu0
    %v876 = vpop.f32.mrb[0].mxu0
    %877 = vdwg.mxu0
    %v878 = vpack.c.bf16 %v825, %v825
    %v879 = vpack.c.bf16 %v873, %v873
    %v882 = vunpack.c.l.b16 %v878
    %v883 = vunpack.c.l.b16 %v879
    %v884 = vpack.c.b16 %v883, %v882
    %v887 = vunpack.c.l.b16 %v284
    %v888 = vunpack.c.l.b16 %v285
    %v889 = vpack.c.b16 %v888, %v887
    %v892 = vsel %vm436, %v884, 0
    %894 = vmatprep.subr.bf16.mxu0 0
    %895 = vmatpush1.bf16.msra.mxu0 %v889
    %896 = vmatprep.subr.bf16.mxu0 0
    %897 = vmatpush1.bf16.msra.mxu0 0
    %898 = vmatprep.subr.bf16.mxu0 0
    %899 = vmatpush1.bf16.msra.mxu0 0
    %900 = vmatprep.subr.bf16.mxu0 0
    %901 = vmatpush1.bf16.msra.mxu0 0
    %902 = vmatprep.subr.bf16.mxu0 0
    %903 = vmatpush1.bf16.msra.mxu0 0
    %904 = vmatprep.subr.bf16.mxu0 0
    %905 = vmatpush1.bf16.msra.mxu0 0
    %906 = vmatprep.subr.bf16.mxu0 0
    %907 = vmatpush1.bf16.msra.mxu0 0
    %908 = vmatprep.subr.bf16.mxu0 0
    %909 = vmatpush1.bf16.msra.mxu0 0
    %910 = vmatprep.subr.bf16.mxu0 0
    %911 = vmatpush1.bf16.msra.mxu0 0
    %912 = vmatprep.subr.bf16.mxu0 0
    %913 = vmatpush1.bf16.msra.mxu0 0
    %914 = vmatprep.subr.bf16.mxu0 0
    %915 = vmatpush1.bf16.msra.mxu0 0
    %916 = vmatprep.subr.bf16.mxu0 0
    %917 = vmatpush1.bf16.msra.mxu0 0
    %918 = vmatprep.subr.bf16.mxu0 0
    %919 = vmatpush1.bf16.msra.mxu0 0
    %920 = vmatprep.subr.bf16.mxu0 0
    %921 = vmatpush1.bf16.msra.mxu0 0
    %922 = vmatprep.subr.bf16.mxu0 0
    %923 = vmatpush1.bf16.msra.mxu0 0
    %924 = vmatprep.subr.bf16.mxu0 0
    %925 = vmatpush1.bf16.msra.mxu0 0
    %926 = vmatprep.mubr.bf16.mxu0 0
    %927 = vmatmul.mubr.bf16.gmra.mrb[0].mxu0 %v892
    %v928 = vpop.f32.mrb[0].mxu0
    %v929 = vadd.f32 0.0, %v928
    %v930 = vpop.f32.mrb[0].mxu0
    %v931 = vpop.f32.mrb[0].mxu0
    %v932 = vadd.f32 0.0, %v931
    %v933 = vpop.f32.mrb[0].mxu0
    %934 = vdwg.mxu0
    %v937 = vunpack.c.l.b16 %v654
    %v938 = vunpack.c.l.b16 %v655
    %v939 = vpack.c.b16 %v938, %v937
    %v942 = vunpack.c.l.b16 %v282
    %v943 = vunpack.c.l.b16 %v283
    %v944 = vpack.c.b16 %v943, %v942
    %v947 = vsel %vm436, %v939, 0
    %949 = vmatprep.subr.bf16.mxu0 0
    %950 = vmatpush1.bf16.msra.mxu0 %v944
    %951 = vmatprep.subr.bf16.mxu0 0
    %952 = vmatpush1.bf16.msra.mxu0 0
    %953 = vmatprep.subr.bf16.mxu0 0
    %954 = vmatpush1.bf16.msra.mxu0 0
    %955 = vmatprep.subr.bf16.mxu0 0
    %956 = vmatpush1.bf16.msra.mxu0 0
    %957 = vmatprep.subr.bf16.mxu0 0
    %958 = vmatpush1.bf16.msra.mxu0 0
    %959 = vmatprep.subr.bf16.mxu0 0
    %960 = vmatpush1.bf16.msra.mxu0 0
    %961 = vmatprep.subr.bf16.mxu0 0
    %962 = vmatpush1.bf16.msra.mxu0 0
    %963 = vmatprep.subr.bf16.mxu0 0
    %964 = vmatpush1.bf16.msra.mxu0 0
    %965 = vmatprep.subr.bf16.mxu0 0
    %966 = vmatpush1.bf16.msra.mxu0 0
    %967 = vmatprep.subr.bf16.mxu0 0
    %968 = vmatpush1.bf16.msra.mxu0 0
    %969 = vmatprep.subr.bf16.mxu0 0
    %970 = vmatpush1.bf16.msra.mxu0 0
    %971 = vmatprep.subr.bf16.mxu0 0
    %972 = vmatpush1.bf16.msra.mxu0 0
    %973 = vmatprep.subr.bf16.mxu0 0
    %974 = vmatpush1.bf16.msra.mxu0 0
    %975 = vmatprep.subr.bf16.mxu0 0
    %976 = vmatpush1.bf16.msra.mxu0 0
    %977 = vmatprep.subr.bf16.mxu0 0
    %978 = vmatpush1.bf16.msra.mxu0 0
    %979 = vmatprep.subr.bf16.mxu0 0
    %980 = vmatpush1.bf16.msra.mxu0 0
    %981 = vmatprep.mubr.bf16.mxu0 0
    %982 = vmatmul.mubr.bf16.gmra.mrb[0].mxu0 %v947
    %v983 = vpop.f32.mrb[0].mxu0
    %v984 = vadd.f32 %v929, %v983
    %v985 = vpop.f32.mrb[0].mxu0
    %v986 = vpop.f32.mrb[0].mxu0
    %v987 = vadd.f32 %v932, %v986
    %v988 = vpop.f32.mrb[0].mxu0
    %989 = vdwg.mxu0
    %v990 = vadd.f32 %v311, %v984
    %v991 = vadd.f32 %v312, %v987
    %v993 = vlaneseq
    %v994 = vshrl.u32 %v993, 7
    %v995 = vsub.s32 0, %v994
    %v996 = vrot.slane %v286, %v995
    %v998 = vadd.f32 %v990, %v996
    %v999 = vadd.f32 %v991, %v996
    %v1000 = vsel %vm314, %v998, 0.0
    %1001 = vadd.xlane.f32.xlu0 %v1000
    %v1002 = vpop.xlane.xlu0 %1001
    %v1003 = vsel %vm314, %v999, 0.0
    %1004 = vadd.xlane.f32.xlu0 %v1003
    %v1005 = vpop.xlane.xlu0 %1004
    %v1006 = vmul.f32 %v1002, %v321
    %v1007 = vmul.f32 %v1005, %v321
    %v1008 = vsub.f32 %v998, %v1006
    %v1009 = vsub.f32 %v999, %v1007
    %v1010 = vmul.f32 %v1008, %v1008
    %v1011 = vmul.f32 %v1009, %v1009
    %v1012 = vsel %vm314, %v1010, 0.0
    %1013 = vadd.xlane.f32.xlu0 %v1012
    %v1014 = vpop.xlane.xlu0 %1013
    %v1015 = vsel %vm314, %v1011, 0.0
    %1016 = vadd.xlane.f32.xlu0 %v1015
    %v1017 = vpop.xlane.xlu0 %1016
    %v1018 = vmul.f32 %v1014, %v321
    %v1019 = vmul.f32 %v1017, %v321
    %v1020 = vadd.f32 %v1018, 1e-05
    %v1021 = vadd.f32 %v1019, 1e-05
    %v1022 = vrsqrt.pop %v1020
    %v1023 = vrsqrt.pop %v1021
    %v1024 = vmul.f32 %v1008, %v1022
    %v1025 = vmul.f32 %v1009, %v1023
    %v1027 = vlaneseq
    %v1028 = vshrl.u32 %v1027, 7
    %v1029 = vsub.s32 0, %v1028
    %v1030 = vrot.slane %v287, %v1029
    %v1032 = vmul.f32 %v1024, %v1030
    %v1033 = vmul.f32 %v1025, %v1030
    %v1035 = vlaneseq
    %v1036 = vshrl.u32 %v1035, 7
    %v1037 = vsub.s32 0, %v1036
    %v1038 = vrot.slane %v288, %v1037
    %v1040 = vadd.f32 %v1032, %v1038
    %v1041 = vadd.f32 %v1033, %v1038
    %v1042 = vpack.c.bf16 %v1040, %v1040
    %v1043 = vpack.c.bf16 %v1041, %v1041
    %v1045 = vlaneseq
    %v1046 = vshrl.u32 %v1045, 7
    %v1047 = vsub.s32 0, %v1046
    %v1048 = vrot.slane %v293, %v1047
    %v1052 = vunpack.c.l.b16 %v1042
    %v1053 = vunpack.c.l.b16 %v1043
    %v1054 = vpack.c.b16 %v1053, %v1052
    %v1059 = vunpack.c.l.b16 %v289
    %v1060 = vunpack.c.l.b16 %v290
    %v1061 = vunpack.c.l.b16 %v291
    %v1062 = vunpack.c.l.b16 %v292
    %v1063 = vpack.c.b16 %v1060, %v1059
    %v1064 = vpack.c.b16 %v1062, %v1061
    %v1068 = vsel %vm314, %v1054, 0
    %1070 = vmatprep.subr.bf16.mxu0 0
    %1071 = vmatpush1.bf16.msra.mxu0 %v1063
    %1072 = vmatprep.subr.bf16.mxu0 0
    %1073 = vmatpush1.bf16.msra.mxu0 %v1064
    %1074 = vmatprep.subr.bf16.mxu0 0
    %1075 = vmatpush1.bf16.msra.mxu0 0
    %1076 = vmatprep.subr.bf16.mxu0 0
    %1077 = vmatpush1.bf16.msra.mxu0 0
    %1078 = vmatprep.subr.bf16.mxu0 0
    %1079 = vmatpush1.bf16.msra.mxu0 0
    %1080 = vmatprep.subr.bf16.mxu0 0
    %1081 = vmatpush1.bf16.msra.mxu0 0
    %1082 = vmatprep.subr.bf16.mxu0 0
    %1083 = vmatpush1.bf16.msra.mxu0 0
    %1084 = vmatprep.subr.bf16.mxu0 0
    %1085 = vmatpush1.bf16.msra.mxu0 0
    %1086 = vmatprep.subr.bf16.mxu0 0
    %1087 = vmatpush1.bf16.msra.mxu0 0
    %1088 = vmatprep.subr.bf16.mxu0 0
    %1089 = vmatpush1.bf16.msra.mxu0 0
    %1090 = vmatprep.subr.bf16.mxu0 0
    %1091 = vmatpush1.bf16.msra.mxu0 0
    %1092 = vmatprep.subr.bf16.mxu0 0
    %1093 = vmatpush1.bf16.msra.mxu0 0
    %1094 = vmatprep.subr.bf16.mxu0 0
    %1095 = vmatpush1.bf16.msra.mxu0 0
    %1096 = vmatprep.subr.bf16.mxu0 0
    %1097 = vmatpush1.bf16.msra.mxu0 0
    %1098 = vmatprep.subr.bf16.mxu0 0
    %1099 = vmatpush1.bf16.msra.mxu0 0
    %1100 = vmatprep.subr.bf16.mxu0 0
    %1101 = vmatpush1.bf16.msra.mxu0 0
    %1102 = vmatprep.mubr.bf16.mxu0 0
    %1103 = vmatmul.mubr.bf16.gmra.mrb[0].mxu0 %v1068
    %v1104 = vpop.f32.mrb[0].mxu0
    %v1105 = vadd.f32 %v1048, %v1104
    %v1106 = vpop.f32.mrb[0].mxu0
    %v1107 = vpop.f32.mrb[0].mxu0
    %v1108 = vadd.f32 %v1048, %v1107
    %v1109 = vpop.f32.mrb[0].mxu0
    %1110 = vdwg.mxu0
    %v1111 = vmul.f32 %v1105, 1.702
    %v1112 = vmul.f32 %v1108, 1.702
    %v1113 = vxor.u32 %v1111, 2147483648
    %v1114 = vxor.u32 %v1112, 2147483648
    %v1115 = vmul.f32 %v1113, 1.442695
    %v1116 = vpow.pop %v1115
    %v1117 = vmul.f32 %v1114, 1.442695
    %v1118 = vpow.pop %v1117
    %v1119 = vadd.f32 %v1116, 1.0
    %v1120 = vadd.f32 %v1118, 1.0
    %v1121 = vrcp.pop %v1119
    %v1122 = vmul.f32 1.0, %v1121
    %v1123 = vrcp.pop %v1120
    %v1124 = vmul.f32 1.0, %v1123
    %v1125 = vmul.f32 %v1105, %v1122
    %v1126 = vmul.f32 %v1108, %v1124
    %v1127 = vpack.c.bf16 %v1125, %v1125
    %v1128 = vpack.c.bf16 %v1126, %v1126
    %v1131 = vunpack.c.l.b16 %v1127
    %v1132 = vunpack.c.l.b16 %v1128
    %v1133 = vpack.c.b16 %v1132, %v1131
    %v1151 = vunpack.c.l.b16 %v294
    %v1152 = vunpack.c.l.b16 %v295
    %v1153 = vunpack.c.l.b16 %v296
    %v1154 = vunpack.c.l.b16 %v297
    %v1155 = vunpack.c.l.b16 %v298
    %v1156 = vunpack.c.l.b16 %v299
    %v1157 = vunpack.c.l.b16 %v300
    %v1158 = vunpack.c.l.b16 %v301
    %v1159 = vunpack.c.l.b16 %v302
    %v1160 = vunpack.c.l.b16 %v303
    %v1161 = vunpack.c.l.b16 %v304
    %v1162 = vunpack.c.l.b16 %v305
    %v1163 = vunpack.c.l.b16 %v306
    %v1164 = vunpack.c.l.b16 %v307
    %v1165 = vunpack.c.l.b16 %v308
    %v1166 = vunpack.c.l.b16 %v309
    %v1167 = vpack.c.b16 %v1152, %v1151
    %v1168 = vpack.c.b16 %v1154, %v1153
    %v1169 = vpack.c.b16 %v1156, %v1155
    %v1170 = vpack.c.b16 %v1158, %v1157
    %v1171 = vpack.c.b16 %v1160, %v1159
    %v1172 = vpack.c.b16 %v1162, %v1161
    %v1173 = vpack.c.b16 %v1164, %v1163
    %v1174 = vpack.c.b16 %v1166, %v1165
    %1183 = vmatprep.subr.bf16.mxu0 0
    %1184 = vmatpush1.bf16.msra.mxu0 %v1167
    %1185 = vmatprep.subr.bf16.mxu0 0
    %1186 = vmatpush1.bf16.msra.mxu0 %v1168
    %1187 = vmatprep.subr.bf16.mxu0 0
    %1188 = vmatpush1.bf16.msra.mxu0 %v1169
    %1189 = vmatprep.subr.bf16.mxu0 0
    %1190 = vmatpush1.bf16.msra.mxu0 %v1170
    %1191 = vmatprep.subr.bf16.mxu0 0
    %1192 = vmatpush1.bf16.msra.mxu0 %v1171
    %1193 = vmatprep.subr.bf16.mxu0 0
    %1194 = vmatpush1.bf16.msra.mxu0 %v1172
    %1195 = vmatprep.subr.bf16.mxu0 0
    %1196 = vmatpush1.bf16.msra.mxu0 %v1173
    %1197 = vmatprep.subr.bf16.mxu0 0
    %1198 = vmatpush1.bf16.msra.mxu0 %v1174
    %1199 = vmatprep.subr.bf16.mxu0 0
    %1200 = vmatpush1.bf16.msra.mxu0 0
    %1201 = vmatprep.subr.bf16.mxu0 0
    %1202 = vmatpush1.bf16.msra.mxu0 0
    %1203 = vmatprep.subr.bf16.mxu0 0
    %1204 = vmatpush1.bf16.msra.mxu0 0
    %1205 = vmatprep.subr.bf16.mxu0 0
    %1206 = vmatpush1.bf16.msra.mxu0 0
    %1207 = vmatprep.subr.bf16.mxu0 0
    %1208 = vmatpush1.bf16.msra.mxu0 0
    %1209 = vmatprep.subr.bf16.mxu0 0
    %1210 = vmatpush1.bf16.msra.mxu0 0
    %1211 = vmatprep.subr.bf16.mxu0 0
    %1212 = vmatpush1.bf16.msra.mxu0 0
    %1213 = vmatprep.subr.bf16.mxu0 0
    %1214 = vmatpush1.bf16.msra.mxu0 0
    %1215 = vmatprep.mubr.bf16.mxu0 0
    %1216 = vmatmul.mubr.bf16.gmra.mrb[0].mxu0 %v1133
    %v1217 = vpop.f32.mrb[0].mxu0
    %v1218 = vadd.f32 0.0, %v1217
    %v1219 = vpop.f32.mrb[0].mxu0
    %v1220 = vpop.f32.mrb[0].mxu0
    %v1221 = vadd.f32 0.0, %v1220
    %v1222 = vpop.f32.mrb[0].mxu0
    %1223 = vdwg.mxu0
    %v1224 = vadd.f32 %v998, %v1218
    %v1225 = vadd.f32 %v999, %v1221
    %v1227 = vlaneseq
    %v1228 = vshrl.u32 %v1227, 7
    %v1229 = vsub.s32 0, %v1228
    %v1230 = vrot.slane %v310, %v1229
    %v1232 = vadd.f32 %v1224, %v1230
    %v1233 = vadd.f32 %v1225, %v1230
    %1234 = vst.msk [vmem:[#allocation2] sm:$0xff] %vm314, %v1232
    %1235 = vst.msk [vmem:[#allocation2 + $0x8] sm:$0xff] %vm314, %v1233
    // Predicated region
    $region90: #{tpu_custom_call.1} parent=1 // pred_check
      %p1236 = pneg %p70
    $region91: #{tpu_custom_call.1} parent=1 // pred_check_branch
      %1238 = sbr.rel (%p1236) target = $region93
    $region92: #{tpu_custom_call.1} parent=1 // pred_region
      %v1239 = vld [vmem:[#allocation2] sm:$0xff]
      %v1240 = vld [vmem:[#allocation2 + $0x8] sm:$0xff]
      %v1241 = vld [vmem:[%s18] sm:$0x1]
      %v1242 = vld [vmem:[%s19] sm:$0x1]
      %v1245 = vrot.slane %v1240, 7
      %vm1246 = vcmask 1041409
      %v1247 = vsel %vm1246, %v1245, %v1239
      %vm1249 = vcmask 254976
      %v1250 = vsel %vm1249, %v1247, 0.0
      %1251 = vadd.xlane.f32.xlu0 %v1250
      %v1252 = vpop.xlane.xlu0 %1251
      %v1253 = vmul.f32 %v1252, %v321
      %v1255 = vrot.slane %v1253, 1
      %v1258 = vsub.f32 %v1239, %v1253
      %v1259 = vsub.f32 %v1240, %v1255
      %v1260 = vmul.f32 %v1258, %v1258
      %v1261 = vmul.f32 %v1259, %v1259
      %v1264 = vrot.slane %v1261, 7
      %v1265 = vsel %vm1246, %v1264, %v1260
      %v1267 = vsel %vm1249, %v1265, 0.0
      %1268 = vadd.xlane.f32.xlu0 %v1267
      %v1269 = vpop.xlane.xlu0 %1268
      %v1270 = vmul.f32 %v1269, %v321
      %v1271 = vadd.f32 %v1270, 1e-05
      %v1272 = vrsqrt.pop %v1271
      %v1274 = vrot.slane %v1272, 1
      %v1277 = vmul.f32 %v1258, %v1272
      %v1278 = vmul.f32 %v1259, %v1274
      %v1280 = vlaneseq
      %v1281 = vshrl.u32 %v1280, 7
      %v1282 = vsub.s32 0, %v1281
      %v1283 = vrot.slane %v1241, %v1282
      %v1285 = vmul.f32 %v1277, %v1283
      %v1286 = vmul.f32 %v1278, %v1283
      %v1288 = vlaneseq
      %v1289 = vshrl.u32 %v1288, 7
      %v1290 = vsub.s32 0, %v1289
      %v1291 = vrot.slane %v1242, %v1290
      %v1293 = vadd.f32 %v1285, %v1291
      %v1294 = vadd.f32 %v1286, %v1291
      %v1295 = vpack.c.bf16 %v1293, %v1293
      %v1296 = vpack.c.bf16 %v1294, %v1294
      %v1297 = vld [vmem:[%s20] sm:$0xf]
      %v1298 = vld [vmem:[%s20 + $0x4] sm:$0xf]
      %v1299 = vld [vmem:[%s20 + $0x8] sm:$0xf]
      %v1300 = vld [vmem:[%s20 + $0xc] sm:$0xf]
      %v1303 = vunpack.c.l.b16 %v1295
      %v1304 = vunpack.c.l.b16 %v1296
      %v1305 = vrot.slane %v1304, 7
      %v1306 = vsel %vm1246, %v1305, %v1303
      %v1307 = vpack.c.b16 %v1306, %v1306
      %v1312 = vunpack.c.l.b16 %v1297
      %v1313 = vunpack.c.l.b16 %v1298
      %v1314 = vunpack.c.l.b16 %v1299
      %v1315 = vunpack.c.l.b16 %v1300
      %v1316 = vpack.c.b16 %v1313, %v1312
      %v1317 = vpack.c.b16 %v1315, %v1314
      %v1321 = vsel %vm314, %v1307, 0
      %1323 = vmatprep.subr.bf16.mxu0 0
      %1324 = vmatpush1.bf16.msra.mxu0 %v1316
      %1325 = vmatprep.subr.bf16.mxu0 0
      %1326 = vmatpush1.bf16.msra.mxu0 %v1317
      %1327 = vmatprep.subr.bf16.mxu0 0
      %1328 = vmatpush1.bf16.msra.mxu0 0
      %1329 = vmatprep.subr.bf16.mxu0 0
      %1330 = vmatpush1.bf16.msra.mxu0 0
      %1331 = vmatprep.subr.bf16.mxu0 0
      %1332 = vmatpush1.bf16.msra.mxu0 0
      %1333 = vmatprep.subr.bf16.mxu0 0
      %1334 = vmatpush1.bf16.msra.mxu0 0
      %1335 = vmatprep.subr.bf16.mxu0 0
      %1336 = vmatpush1.bf16.msra.mxu0 0
      %1337 = vmatprep.subr.bf16.mxu0 0
      %1338 = vmatpush1.bf16.msra.mxu0 0
      %1339 = vmatprep.subr.bf16.mxu0 0
      %1340 = vmatpush1.bf16.msra.mxu0 0
      %1341 = vmatprep.subr.bf16.mxu0 0
      %1342 = vmatpush1.bf16.msra.mxu0 0
      %1343 = vmatprep.subr.bf16.mxu0 0
      %1344 = vmatpush1.bf16.msra.mxu0 0
      %1345 = vmatprep.subr.bf16.mxu0 0
      %1346 = vmatpush1.bf16.msra.mxu0 0
      %1347 = vmatprep.subr.bf16.mxu0 0
      %1348 = vmatpush1.bf16.msra.mxu0 0
      %1349 = vmatprep.subr.bf16.mxu0 0
      %1350 = vmatpush1.bf16.msra.mxu0 0
      %1351 = vmatprep.subr.bf16.mxu0 0
      %1352 = vmatpush1.bf16.msra.mxu0 0
      %1353 = vmatprep.subr.bf16.mxu0 0
      %1354 = vmatpush1.bf16.msra.mxu0 0
      %1355 = vmatprep.mubr.bf16.mxu0 0
      %1356 = vmatmul.mubr.bf16.gmra.mrb[0].mxu0 %v1321
      %v1357 = vpop.f32.mrb[0].mxu0
      %v1358 = vadd.f32 0.0, %v1357
      %v1359 = vpop.f32.mrb[0].mxu0
      %v1360 = vpop.f32.mrb[0].mxu0
      %v1361 = vpop.f32.mrb[0].mxu0
      %1362 = vdwg.mxu0
      %v1363 = vmul.f32 %v1358, %v1358
      %v1364 = vsel %vm1249, %v1363, 0.0
      %1365 = vadd.xlane.f32.xlu0 %v1364
      %v1366 = vpop.xlane.xlu0 %1365
      %v1367 = vadd.f32 %v1366, 1e-12
      %v1368 = vrsqrt.pop %v1367
      %v1369 = vmul.f32 %v1358, %v1368
      %1370 = vst.msk [vmem:[#allocation3] sm:$0x3] %vm1249, %v1369
    $region93: #{tpu_custom_call.1} parent=1 // pred_fallthru
      _
    // Predicated region
    $region94: #{tpu_custom_call.1} parent=1 // pred_check
      _
    $region95: #{tpu_custom_call.1} parent=1 // pred_check_branch
      %1372 = sbr.rel (0) target = $region97
    $region96: #{tpu_custom_call.1} parent=1 // pred_region
      %s1374 = ssub.s32 32, 32
      %1375 = vsyncadd [#allocation4], %s1374
      %s1377 = sshll.u32 [#allocation3], 4
      %s1378 = int_to_ptr.vmem [resolvable:$true] %s1377
      %1380 = dma.vmem_to_hbm [thread:$0]  %s1378, 32, %s21, [#allocation4]
    $region97: #{tpu_custom_call.1} parent=1 // pred_fallthru
      _
    // Predicated region
    $region98: #{tpu_custom_call.1} parent=1 // pred_check
      _
    $region99: #{tpu_custom_call.1} parent=1 // pred_check_branch
      %1382 = sbr.rel (0) target = $region101
    $region100: #{tpu_custom_call.1} parent=1 // pred_region
      %1383 = dma.done [#allocation4], 32
    $region101: #{tpu_custom_call.1} parent=1 // pred_fallthru
      _
    %1384 = vsyncpa [#allocation4], 1

</llo_original>
